<compile_context>
chip_gen: v6e
topology: v6e:2x2x1
jax: 0.10.0
libtpu: 0.0.40
codegen_flags: <defaults>
</compile_context>

<pallas_src>
import numpy as np
import jax
import jax.numpy as jnp
from jax.experimental import pallas as pl
from jax.experimental.pallas import tpu as pltpu


def _round_up(x: int, m: int) -> int:
    return (x + m - 1) // m * m


def _make_kernel(t_tile, s_tile, s_valid, d_p, d_chunk, compute_dtype):
    f32 = jnp.float32
    approx = (jnp.dtype(compute_dtype) != jnp.dtype(f32))
    mask_needed = (s_valid % s_tile) != 0
    chunk_bounds = [(lo, min(lo + d_chunk, d_p)) for lo in range(0, d_p, d_chunk)]

    def kernel(r_ref, tgt_ref, wu_ref, wt_ref, blin_ref, wsc_ref, out_ref,
               m_sc, l_sc, acc_sc, b_sc):
        si = pl.program_id(1)

        # ---- per-T-tile init: reset online-softmax state, hoist the target-side linear
        #      (runs once per T tile since the S axis is the inner grid loop).
        @pl.when(si == 0)
        def _():
            m_sc[...] = jnp.full_like(m_sc, -jnp.inf)
            l_sc[...] = jnp.zeros_like(l_sc)
            acc_sc[...] = jnp.zeros_like(acc_sc)
            b = jnp.dot(tgt_ref[...], wt_ref[...],
                        preferred_element_type=f32)               # (t_tile, d_p) f32
            b_sc[...] = (b + blin_ref[...]).astype(compute_dtype)

        r = r_ref[...]                                            # (s_tile, du_p)

        # rnn-output half of the decomposed Linear (changes with the S tile).
        a = jnp.dot(r, wu_ref[...],
                    preferred_element_type=f32).astype(compute_dtype)  # (s_tile, d_p)
        b = b_sc[...]                                             # (t_tile, d_p)
        w = wsc_ref[...]                                          # (1, d_p)

        # score[t,s] = sum_d tanh(a[s,d] + b[t,d]) * w[d]; chunked along d in 128-lane
        # slices so the (t_tile, s_tile, chunk) intermediates stay small regardless of D.
        scores = None
        for lo, hi in chunk_bounds:
            hc = a[:, lo:hi][None, :, :] + b[:, lo:hi][:, None, :]     # (t, s, c)
            part = jnp.sum((jnp.tanh(hc) * w[:, lo:hi][None, :, :]).astype(f32),
                           axis=-1)                                    # (t, s) f32
            scores = part if scores is None else scores + part

        if mask_needed:  # mask zero-padded S columns (static condition, traced offset)
            col = jax.lax.broadcasted_iota(jnp.int32, (t_tile, s_tile), 1) + si * s_tile
            scores = jnp.where(col < s_valid, scores, -1e30)

        # ---- online softmax update over the S axis (unnormalized accumulation).
        m_prev = m_sc[...]
        m_new = jnp.maximum(m_prev, jnp.max(scores, axis=-1, keepdims=True))
        alpha = jnp.exp(m_prev - m_new)
        p = jnp.exp(scores - m_new)                               # (t_tile, s_tile) f32
        l_sc[...] = alpha * l_sc[...] + jnp.sum(p, axis=-1, keepdims=True)
        acc_sc[...] = alpha * acc_sc[...] + jnp.dot(
            p.astype(compute_dtype), r, preferred_element_type=f32)   # (t_tile, du_p)
        m_sc[...] = m_new

        # ---- finalize: one reciprocal per row (EUP slot), lane-dense store.
        @pl.when(si == pl.num_programs(1) - 1)
        def _():
            inv_l = pl.reciprocal(l_sc[...], approx=approx)
            out_ref[...] = (acc_sc[...] * inv_l).astype(out_ref.dtype)

    return kernel


def batch_attention(rnn_outputs, target, W_lin, b_lin, w_score, b_score,
                    *, t_tile=None, s_tile=None, mxu_dtype=jnp.bfloat16):
    """Pallas TPU forward of BatchAttentionLayer. Returns (T, dim_u) float32."""
    rnn_outputs = jnp.asarray(rnn_outputs, jnp.float32)
    target = jnp.asarray(target, jnp.float32)
    W_lin = jnp.asarray(W_lin, jnp.float32)
    b_lin = jnp.asarray(b_lin, jnp.float32)
    w_score = jnp.asarray(w_score, jnp.float32)
    S, dim_u = rnn_outputs.shape
    T, dim_t = target.shape
    D = dim_u + dim_t
    assert W_lin.shape == (D, D) and b_lin.shape == (D,)
    assert w_score.shape == (1, D)
    del b_score  # constant shift of every score row; cancels in the softmax

    cdt = jnp.dtype(mxu_dtype)
    esz = cdt.itemsize

    # ---- lane-dense padded sizes (multiples of 128) and tile sizes.
    du_p = _round_up(dim_u, 128)
    dt_p = _round_up(dim_t, 128)
    d_p = _round_up(D, 128)
    if s_tile is None:
        s_tile = min(256, _round_up(S, 128))
    if t_tile is None:
        t_tile = min(64, _round_up(T, 8))
    s_tile = _round_up(s_tile, 128)
    t_tile = _round_up(t_tile, 8)
    S_p = _round_up(S, s_tile)
    T_p = _round_up(T, t_tile)
    n_t, n_s = T_p // t_tile, S_p // s_tile

    # d-axis chunking for the tanh/score stage: at most 8 unrolled chunks, 128-multiples.
    n_dc = d_p // 128
    d_chunk = 128 * ((n_dc + min(n_dc, 8) - 1) // min(n_dc, 8))

    # ---- zero-padded operands, pre-cast to the MXU/compute dtype on the host
    #      (halves streamed DMA bytes and removes per-step VPU casts in the kernel).
    r_p = jnp.zeros((S_p, du_p), jnp.float32).at[:S, :dim_u].set(rnn_outputs).astype(cdt)
    tgt_p = jnp.zeros((T_p, dt_p), jnp.float32).at[:T, :dim_t].set(target).astype(cdt)
    wu = jnp.zeros((du_p, d_p), jnp.float32).at[:dim_u, :D].set(W_lin[:, :dim_u].T).astype(cdt)
    wt = jnp.zeros((dt_p, d_p), jnp.float32).at[:dim_t, :D].set(W_lin[:, dim_u:].T).astype(cdt)
    blin = jnp.zeros((1, d_p), jnp.float32).at[0, :D].set(b_lin)
    wsc = jnp.zeros((1, d_p), jnp.float32).at[0, :D].set(w_score[0]).astype(cdt)

    kernel = _make_kernel(t_tile, s_tile, S, d_p, d_chunk, cdt)

    in_specs = [
        pl.BlockSpec((s_tile, du_p), lambda ti, si: (si, 0)),   # streamed over S
        pl.BlockSpec((t_tile, dt_p), lambda ti, si: (ti, 0)),
        pl.BlockSpec((du_p, d_p), lambda ti, si: (0, 0)),       # resident weights
        pl.BlockSpec((dt_p, d_p), lambda ti, si: (0, 0)),
        pl.BlockSpec((1, d_p), lambda ti, si: (0, 0)),
        pl.BlockSpec((1, d_p), lambda ti, si: (0, 0)),
    ]
    out_spec = pl.BlockSpec((t_tile, du_p), lambda ti, si: (ti, 0))
    scratch_shapes = [
        pltpu.VMEM((t_tile, 1), jnp.float32),      # running max  m
        pltpu.VMEM((t_tile, 1), jnp.float32),      # running sum  l
        pltpu.VMEM((t_tile, du_p), jnp.float32),   # running acc  p @ r (unnormalized)
        pltpu.VMEM((t_tile, d_p), cdt),            # hoisted tgt @ Wt + b_lin (per T tile)
    ]

    # VMEM budget (v7x physical is 64 MiB): ~2x the per-step live set, clamped.
    chunk3d = t_tile * s_tile * d_chunk
    live = (3 * chunk3d * esz + chunk3d * 4                 # h / tanh / prod (+ f32 reduce)
            + s_tile * d_p * (4 + esz)                      # a (f32 accum + compute copy)
            + 2 * s_tile * du_p * esz                       # double-buffered r tiles
            + 2 * t_tile * dt_p * esz                       # tgt tile
            + 2 * (du_p + dt_p + 2) * d_p * esz             # weights / bias / score vec
            + 2 * t_tile * du_p * 4                         # output block
            + t_tile * (du_p + 4) * 4 + t_tile * d_p * esz  # scratch
            + 6 * t_tile * s_tile * 4)                      # scores / p / mask temporaries
    vmem_limit = int(min(64 * 1024 * 1024, max(32 * 1024 * 1024, 2 * live)))

    flops = (2 * n_t * S_p * du_p * d_p          # a = r @ Wu (per T tile)
             + 2 * T_p * dt_p * d_p              # b = tgt @ Wt
             + 2 * T_p * S_p * du_p              # p @ r
             + 5 * T_p * S_p * d_p)              # broadcast add + score mult/reduce
    cost = pl.CostEstimate(
        flops=int(flops),
        transcendentals=int(T_p * S_p * (d_p + 2)),
        bytes_accessed=int(esz * (n_t * S_p * du_p + T_p * dt_p
                                  + (du_p + dt_p + 1) * d_p)
                           + 4 * (d_p + T_p * du_p)))

    out_p = pl.pallas_call(
        kernel,
        out_shape=jax.ShapeDtypeStruct((T_p, du_p), jnp.float32),
        grid=(n_t, n_s),
        in_specs=in_specs,
        out_specs=out_spec,
        scratch_shapes=scratch_shapes,
        compiler_params=pltpu.CompilerParams(
            dimension_semantics=("parallel", "arbitrary"),
            vmem_limit_bytes=vmem_limit),
        cost_estimate=cost,
    )(r_p, tgt_p, wu, wt, blin, wsc)

    return out_p[:T, :dim_u]


def reference(rnn_outputs, target, W_lin, b_lin, w_score, b_score):
    S, dim_u = rnn_outputs.shape
    T, dim_t = target.shape
    x = jnp.concatenate(
        [jnp.broadcast_to(rnn_outputs[None], (T, S, dim_u)),
         jnp.broadcast_to(target[:, None], (T, S, dim_t))], axis=-1)
    h = x @ W_lin.T + b_lin
    s = (jnp.tanh(h) @ w_score.T)[..., 0] + b_score[0]
    w = jax.nn.softmax(s, axis=1)
    return w @ rnn_outputs


if __name__ == "__main__":
    key = jax.random.PRNGKey(0)

    def make_case(k, S, T, dim_u, dim_target):
        D = dim_u + dim_target
        k1, k2, k3, k4, k5, k6 = jax.random.split(k, 6)
        scale = 1.0 / np.sqrt(D)
        return dict(
            rnn_outputs=jax.random.normal(k1, (S, dim_u), jnp.float32),
            target=jax.random.normal(k2, (T, dim_target), jnp.float32),
            W_lin=jax.random.uniform(k3, (D, D), jnp.float32, -scale, scale),
            b_lin=jax.random.uniform(k4, (D,), jnp.float32, -scale, scale),
            w_score=jax.random.uniform(k5, (1, D), jnp.float32, -scale, scale),
            b_score=jax.random.uniform(k6, (1,), jnp.float32, -scale, scale),
        )

    k_a, k_b = jax.random.split(key)
    # case 1: module-sized small shapes (single S tile / single T tile).
    case1 = make_case(k_a, S=8, T=4, dim_u=32, dim_target=16)
    # case 2: multi-tile grid (n_t=2, n_s=3) -> exercises the online softmax across
    # S tiles, S-column masking, and per-T-tile hoisting of the target-side linear.
    case2 = make_case(k_b, S=300, T=50, dim_u=40, dim_target=24)

    cases = [
        ("small", case1, {}, (1e-5, 1e-5), (5e-2, 5e-2)),
        ("tiled", case2, dict(t_tile=32, s_tile=128), (1e-4, 1e-4), (5e-2, 5e-2)),
    ]
    for name, case, kw, f32_tol, bf16_tol in cases:
        ref = reference(**case)

        # f32 MXU path: tight correctness check against the f32 reference.
        out_f32 = jax.block_until_ready(
            batch_attention(**case, **kw, mxu_dtype=jnp.float32))
        np.testing.assert_allclose(np.asarray(out_f32), np.asarray(ref),
                                   rtol=f32_tol[0], atol=f32_tol[1])

        # Default bf16 MXU/compute path (v6e/v7x fast path), f32 accumulation.
        out_bf16 = jax.block_until_ready(batch_attention(**case, **kw))
        np.testing.assert_allclose(np.asarray(out_bf16), np.asarray(ref),
                                   rtol=bf16_tol[0], atol=bf16_tol[1])

    print("KERNEL_OK")
</pallas_src>

<mosaic_0001>
module attributes {stable_mosaic.version = 11 : i64} {
  func.func @kernel(%arg0: i32, %arg1: i32, %arg2: memref<128x128xf32, #tpu.memory_space<vmem>>, %arg3: memref<8x128xf32, #tpu.memory_space<vmem>>, %arg4: memref<128x128xf32, #tpu.memory_space<vmem>>, %arg5: memref<128x128xf32, #tpu.memory_space<vmem>>, %arg6: memref<1x128xf32, #tpu.memory_space<vmem>>, %arg7: memref<1x128xf32, #tpu.memory_space<vmem>>, %arg8: memref<8x128xf32, #tpu.memory_space<vmem>>, %arg9: memref<8x1xf32, #tpu.memory_space<vmem>>, %arg10: memref<8x1xf32, #tpu.memory_space<vmem>>, %arg11: memref<8x128xf32, #tpu.memory_space<vmem>>, %arg12: memref<8x128xf32, #tpu.memory_space<vmem>>) attributes {dimension_semantics = [#tpu.dimension_semantics<parallel>, #tpu.dimension_semantics<arbitrary>], iteration_bounds = array<i64: 1, 1>, scalar_prefetch = 0 : i64, scratch_operands = 4 : i64, tpu.core_type = #tpu.core_type<tc>, window_params = [{transform_indices = @transform_0, window_bounds = array<i64: 128, 128>}, {transform_indices = @transform_1, window_bounds = array<i64: 8, 128>}, {pipeline_mode = #tpu.pipeline_mode<synchronous>, transform_indices = @transform_2, window_bounds = array<i64: 128, 128>}, {pipeline_mode = #tpu.pipeline_mode<synchronous>, transform_indices = @transform_3, window_bounds = array<i64: 128, 128>}, {pipeline_mode = #tpu.pipeline_mode<synchronous>, transform_indices = @transform_4, window_bounds = array<i64: 1, 128>}, {pipeline_mode = #tpu.pipeline_mode<synchronous>, transform_indices = @transform_5, window_bounds = array<i64: 1, 128>}, {transform_indices = @transform_6, window_bounds = array<i64: 8, 128>}]} {
    %c0_i32 = arith.constant 0 : i32
    %0 = arith.cmpi eq, %arg1, %c0_i32 : i32
    %1 = arith.extui %0 : i1 to i32
    %c0_i32_0 = arith.constant 0 : i32
    %2 = arith.cmpi ne, %1, %c0_i32_0 : i32
    scf.if %2 {
      %cst_27 = arith.constant 0xFF800000 : f32
      %51 = vector.broadcast %cst_27 : f32 to vector<8x1xf32>
      %c0_28 = arith.constant 0 : index
      %c0_29 = arith.constant 0 : index
      %52 = vector.load %arg9[%c0_28, %c0_29] : memref<8x1xf32, #tpu.memory_space<vmem>>, vector<8x1xf32>
      tpu.vector_store %arg9[%c0_28, %c0_29], %51 {strides = array<i32>} : memref<8x1xf32, #tpu.memory_space<vmem>>, vector<8x1xf32>,
      %cst_30 = arith.constant 0.000000e+00 : f32
      %53 = vector.broadcast %cst_30 : f32 to vector<8x1xf32>
      %c0_31 = arith.constant 0 : index
      %c0_32 = arith.constant 0 : index
      %54 = vector.load %arg10[%c0_31, %c0_32] : memref<8x1xf32, #tpu.memory_space<vmem>>, vector<8x1xf32>
      tpu.vector_store %arg10[%c0_31, %c0_32], %53 {strides = array<i32>} : memref<8x1xf32, #tpu.memory_space<vmem>>, vector<8x1xf32>,
      %cst_33 = arith.constant 0.000000e+00 : f32
      %55 = vector.broadcast %cst_33 : f32 to vector<8x128xf32>
      %c0_34 = arith.constant 0 : index
      %c0_35 = arith.constant 0 : index
      %56 = vector.load %arg11[%c0_34, %c0_35] : memref<8x128xf32, #tpu.memory_space<vmem>>, vector<8x128xf32>
      tpu.vector_store %arg11[%c0_34, %c0_35], %55 {strides = array<i32>} : memref<8x128xf32, #tpu.memory_space<vmem>>, vector<8x128xf32>,
      %c0_36 = arith.constant 0 : index
      %c0_37 = arith.constant 0 : index
      %57 = vector.load %arg3[%c0_36, %c0_37] : memref<8x128xf32, #tpu.memory_space<vmem>>, vector<8x128xf32>
      %c0_38 = arith.constant 0 : index
      %c0_39 = arith.constant 0 : index
      %58 = vector.load %arg5[%c0_38, %c0_39] : memref<128x128xf32, #tpu.memory_space<vmem>>, vector<128x128xf32>
      %cst_40 = arith.constant dense<0.000000e+00> : vector<8x128xf32>
      %59 = tpu.matmul %57, %58, %cst_40 {dimension_numbers = #tpu.dot_dimension_numbers<[1], [0], [0], [1], [0, 0, 1, 1], [], []>} : vector<8x128xf32>, vector<128x128xf32>, vector<8x128xf32> -> vector<8x128xf32>
      %c0_41 = arith.constant 0 : index
      %c0_42 = arith.constant 0 : index
      %60 = vector.load %arg6[%c0_41, %c0_42] : memref<1x128xf32, #tpu.memory_space<vmem>>, vector<1x128xf32>
      %61 = vector.broadcast %60 : vector<1x128xf32> to vector<8x128xf32>
      %62 = arith.addf %59, %61 : vector<8x128xf32>
      %c0_43 = arith.constant 0 : index
      %c0_44 = arith.constant 0 : index
      %63 = vector.load %arg12[%c0_43, %c0_44] : memref<8x128xf32, #tpu.memory_space<vmem>>, vector<8x128xf32>
      tpu.vector_store %arg12[%c0_43, %c0_44], %62 {strides = array<i32>} : memref<8x128xf32, #tpu.memory_space<vmem>>, vector<8x128xf32>,
    } else {
    }
    %c0 = arith.constant 0 : index
    %c0_1 = arith.constant 0 : index
    %3 = vector.load %arg2[%c0, %c0_1] : memref<128x128xf32, #tpu.memory_space<vmem>>, vector<128x128xf32>
    %c0_2 = arith.constant 0 : index
    %c0_3 = arith.constant 0 : index
    %4 = vector.load %arg4[%c0_2, %c0_3] : memref<128x128xf32, #tpu.memory_space<vmem>>, vector<128x128xf32>
    %cst = arith.constant dense<0.000000e+00> : vector<128x128xf32>
    %5 = tpu.matmul %3, %4, %cst {dimension_numbers = #tpu.dot_dimension_numbers<[1], [0], [0], [1], [0, 0, 1, 1], [], []>} : vector<128x128xf32>, vector<128x128xf32>, vector<128x128xf32> -> vector<128x128xf32>
    %c0_4 = arith.constant 0 : index
    %c0_5 = arith.constant 0 : index
    %6 = vector.load %arg12[%c0_4, %c0_5] : memref<8x128xf32, #tpu.memory_space<vmem>>, vector<8x128xf32>
    %c0_6 = arith.constant 0 : index
    %c0_7 = arith.constant 0 : index
    %7 = vector.load %arg7[%c0_6, %c0_7] : memref<1x128xf32, #tpu.memory_space<vmem>>, vector<1x128xf32>
    %8 = vector.shape_cast %5 : vector<128x128xf32> to vector<1x128x128xf32>
    %9 = vector.shape_cast %6 : vector<8x128xf32> to vector<8x1x128xf32>
    %10 = vector.broadcast %8 : vector<1x128x128xf32> to vector<8x128x128xf32>
    %11 = vector.broadcast %9 : vector<8x1x128xf32> to vector<8x128x128xf32>
    %12 = arith.addf %10, %11 : vector<8x128x128xf32>
    %13 = math.tanh %12 : vector<8x128x128xf32>
    %14 = vector.shape_cast %7 : vector<1x128xf32> to vector<1x1x128xf32>
    %15 = vector.broadcast %14 : vector<1x1x128xf32> to vector<8x128x128xf32>
    %16 = arith.mulf %13, %15 : vector<8x128x128xf32>
    %cst_8 = arith.constant dense<0.000000e+00> : vector<8x128xf32>
    %17 = vector.multi_reduction <add>, %16, %cst_8 [2] : vector<8x128x128xf32> to vector<8x128xf32>
    %18 = tpu.iota {dimensions = array<i32: 1>} : vector<8x128xi32>
    %c128_i32 = arith.constant 128 : i32
    %19 = arith.muli %arg1, %c128_i32 : i32
    %20 = vector.broadcast %19 : i32 to vector<8x128xi32>
    %21 = arith.addi %18, %20 : vector<8x128xi32>
    %c8_i32 = arith.constant 8 : i32
    %22 = vector.broadcast %c8_i32 : i32 to vector<8x128xi32>
    %23 = arith.cmpi slt, %21, %22 : vector<8x128xi32>
    %cst_9 = arith.constant -1.000000e+30 : f32
    %24 = vector.broadcast %cst_9 : f32 to vector<8x128xf32>
    %25 = arith.select %23, %17, %24 : vector<8x128xi1>, vector<8x128xf32>
    %c0_10 = arith.constant 0 : index
    %c0_11 = arith.constant 0 : index
    %26 = vector.load %arg9[%c0_10, %c0_11] : memref<8x1xf32, #tpu.memory_space<vmem>>, vector<8x1xf32>
    %cst_12 = arith.constant dense<0xFF800000> : vector<8xf32>
    %27 = vector.multi_reduction <maximumf>, %25, %cst_12 [1] : vector<8x128xf32> to vector<8xf32>
    %28 = vector.shape_cast %27 : vector<8xf32> to vector<8x1xf32>
    %29 = arith.maximumf %26, %28 : vector<8x1xf32>
    %30 = arith.subf %26, %29 : vector<8x1xf32>
    %31 = math.exp %30 : vector<8x1xf32>
    %32 = vector.broadcast %29 : vector<8x1xf32> to vector<8x128xf32>
    %33 = arith.subf %25, %32 : vector<8x128xf32>
    %34 = math.exp %33 : vector<8x128xf32>
    %c0_13 = arith.constant 0 : index
    %c0_14 = arith.constant 0 : index
    %35 = vector.load %arg10[%c0_13, %c0_14] : memref<8x1xf32, #tpu.memory_space<vmem>>, vector<8x1xf32>
    %36 = arith.mulf %31, %35 : vector<8x1xf32>
    %cst_15 = arith.constant dense<0.000000e+00> : vector<8xf32>
    %37 = vector.multi_reduction <add>, %34, %cst_15 [1] : vector<8x128xf32> to vector<8xf32>
    %38 = vector.shape_cast %37 : vector<8xf32> to vector<8x1xf32>
    %39 = arith.addf %36, %38 : vector<8x1xf32>
    %c0_16 = arith.constant 0 : index
    %c0_17 = arith.constant 0 : index
    %40 = vector.load %arg10[%c0_16, %c0_17] : memref<8x1xf32, #tpu.memory_space<vmem>>, vector<8x1xf32>
    tpu.vector_store %arg10[%c0_16, %c0_17], %39 {strides = array<i32>} : memref<8x1xf32, #tpu.memory_space<vmem>>, vector<8x1xf32>,
    %c0_18 = arith.constant 0 : index
    %c0_19 = arith.constant 0 : index
    %41 = vector.load %arg11[%c0_18, %c0_19] : memref<8x128xf32, #tpu.memory_space<vmem>>, vector<8x128xf32>
    %42 = vector.broadcast %31 : vector<8x1xf32> to vector<8x128xf32>
    %43 = arith.mulf %42, %41 : vector<8x128xf32>
    %cst_20 = arith.constant dense<0.000000e+00> : vector<8x128xf32>
    %44 = tpu.matmul %34, %3, %cst_20 {dimension_numbers = #tpu.dot_dimension_numbers<[1], [0], [0], [1], [0, 0, 1, 1], [], []>} : vector<8x128xf32>, vector<128x128xf32>, vector<8x128xf32> -> vector<8x128xf32>
    %45 = arith.addf %43, %44 : vector<8x128xf32>
    %c0_21 = arith.constant 0 : index
    %c0_22 = arith.constant 0 : index
    %46 = vector.load %arg11[%c0_21, %c0_22] : memref<8x128xf32, #tpu.memory_space<vmem>>, vector<8x128xf32>
    tpu.vector_store %arg11[%c0_21, %c0_22], %45 {strides = array<i32>} : memref<8x128xf32, #tpu.memory_space<vmem>>, vector<8x128xf32>,
    %c0_23 = arith.constant 0 : index
    %c0_24 = arith.constant 0 : index
    %47 = vector.load %arg9[%c0_23, %c0_24] : memref<8x1xf32, #tpu.memory_space<vmem>>, vector<8x1xf32>
    tpu.vector_store %arg9[%c0_23, %c0_24], %29 {strides = array<i32>} : memref<8x1xf32, #tpu.memory_space<vmem>>, vector<8x1xf32>,
    %c0_i32_25 = arith.constant 0 : i32
    %48 = arith.cmpi eq, %arg1, %c0_i32_25 : i32
    %49 = arith.extui %48 : i1 to i32
    %c0_i32_26 = arith.constant 0 : i32
    %50 = arith.cmpi ne, %49, %c0_i32_26 : i32
    scf.if %50 {
      %c0_27 = arith.constant 0 : index
      %c0_28 = arith.constant 0 : index
      %51 = vector.load %arg10[%c0_27, %c0_28] : memref<8x1xf32, #tpu.memory_space<vmem>>, vector<8x1xf32>
      %52 = tpu.reciprocal %51 : vector<8x1xf32> -> vector<8x1xf32>
      %c0_29 = arith.constant 0 : index
      %c0_30 = arith.constant 0 : index
      %53 = vector.load %arg11[%c0_29, %c0_30] : memref<8x128xf32, #tpu.memory_space<vmem>>, vector<8x128xf32>
      %54 = vector.broadcast %52 : vector<8x1xf32> to vector<8x128xf32>
      %55 = arith.mulf %53, %54 : vector<8x128xf32>
      %c0_31 = arith.constant 0 : index
      %c0_32 = arith.constant 0 : index
      %56 = vector.load %arg8[%c0_31, %c0_32] : memref<8x128xf32, #tpu.memory_space<vmem>>, vector<8x128xf32>
      tpu.vector_store %arg8[%c0_31, %c0_32], %55 {strides = array<i32>} : memref<8x128xf32, #tpu.memory_space<vmem>>, vector<8x128xf32>,
    } else {
    }
    return
  }
  func.func @transform_0(%arg0: i32, %arg1: i32) -> (i32, i32) {
    %c0_i32 = arith.constant 0 : i32
    %c0_i32_0 = arith.constant 0 : i32
    return %arg1, %c0_i32 : i32, i32
  }
  func.func @transform_1(%arg0: i32, %arg1: i32) -> (i32, i32) {
    %c0_i32 = arith.constant 0 : i32
    %c0_i32_0 = arith.constant 0 : i32
    return %arg0, %c0_i32 : i32, i32
  }
  func.func @transform_2(%arg0: i32, %arg1: i32) -> (i32, i32) {
    %c0_i32 = arith.constant 0 : i32
    %c0_i32_0 = arith.constant 0 : i32
    %c0_i32_1 = arith.constant 0 : i32
    return %c0_i32, %c0_i32_0 : i32, i32
  }
  func.func @transform_3(%arg0: i32, %arg1: i32) -> (i32, i32) {
    %c0_i32 = arith.constant 0 : i32
    %c0_i32_0 = arith.constant 0 : i32
    %c0_i32_1 = arith.constant 0 : i32
    return %c0_i32, %c0_i32_0 : i32, i32
  }
  func.func @transform_4(%arg0: i32, %arg1: i32) -> (i32, i32) {
    %c0_i32 = arith.constant 0 : i32
    %c0_i32_0 = arith.constant 0 : i32
    %c0_i32_1 = arith.constant 0 : i32
    return %c0_i32, %c0_i32_0 : i32, i32
  }
  func.func @transform_5(%arg0: i32, %arg1: i32) -> (i32, i32) {
    %c0_i32 = arith.constant 0 : i32
    %c0_i32_0 = arith.constant 0 : i32
    %c0_i32_1 = arith.constant 0 : i32
    return %c0_i32, %c0_i32_0 : i32, i32
  }
  func.func @transform_6(%arg0: i32, %arg1: i32) -> (i32, i32) {
    %c0_i32 = arith.constant 0 : i32
    %c0_i32_0 = arith.constant 0 : i32
    return %arg0, %c0_i32 : i32, i32
  }
}

</mosaic_0001>

<llo_original>
// kernel: tpu_custom_call.1
$region0: #{tpu_custom_call.1}
  #allocation0 [shape = 'u32[]', space=smem, size = 0x4, offset = 0x4, fixed_abs, tag = 'smem constant byte address 0x4 - core index']
  #allocation1 [shape = 'u32[144,128]{1,0:T(1,128)}', space=vmem, size = 0x12000, scoped, tag = 'internal scratch']
  #allocation2 [shape = 'f32[8,1]{1,0:T(8,128)}', space=vmem, size = 0x1000, scoped, tag = 'scratch operand']
  #allocation3 [shape = 'f32[8,1]{1,0:T(8,128)}', space=vmem, size = 0x1000, scoped, tag = 'scratch operand']
  #allocation4 [shape = 'f32[8,128]{1,0:T(8,128)}', space=vmem, size = 0x1000, scoped, tag = 'scratch operand']
  #allocation5 [shape = 'f32[8,128]{1,0:T(8,128)}', space=vmem, size = 0x1000, scoped, tag = 'scratch operand']
  %s0 = inlined_call_operand.hbm [shape: f32[128,128], index: 0, kind: input, shape index: {}]
  %s1 = inlined_call_operand.hbm [shape: f32[8,128], index: 1, kind: input, shape index: {}]
  %s2 = inlined_call_operand.hbm [shape: f32[128,128], index: 2, kind: input, shape index: {}]
  %s3 = inlined_call_operand.hbm [shape: f32[128,128], index: 3, kind: input, shape index: {}]
  %s4 = inlined_call_operand.vmem [shape: f32[1,128], index: 4, kind: input, shape index: {}]
  %s5 = inlined_call_operand.vmem [shape: f32[1,128], index: 5, kind: input, shape index: {}]
  %s6 = inlined_call_operand.hbm [shape: f32[8,128], index: 6, kind: output, shape index: {}]
  %s7 = sld [smem:[#allocation0]]
  $region58: #{tpu_custom_call.1} parent=0
    _
  %s9 = ssub.s32 1, %s7
  %s10 = scalar_select 0, %s9, %s7
  $region1: #{tpu_custom_call.1} parent=0
    #allocation6 [shape = 'u8[65536]{0}', space=vmem, size = 0x10000, scoped, tag = 'input window, operand 0, single buffered']
    #allocation7 [shape = 's32[1]{0}', space=sflag, size = 0x4, scoped, tag = 'scoped memory for tpu_custom_call.1']
    #allocation8 [shape = 's32[1]{0}', space=sflag, size = 0x4, scoped, tag = 'scoped memory for tpu_custom_call.1']
    #allocation9 [shape = 'u8[4096]{0}', space=vmem, size = 0x1000, scoped, tag = 'input window, operand 1, single buffered']
    #allocation10 [shape = 's32[1]{0}', space=sflag, size = 0x4, scoped, tag = 'scoped memory for tpu_custom_call.1']
    #allocation11 [shape = 'u8[65536]{0}', space=vmem, size = 0x10000, scoped, tag = 'input window, operand 2, single buffered']
    #allocation12 [shape = 'u8[65536]{0}', space=vmem, size = 0x10000, scoped, tag = 'input window, operand 3, single buffered']
    #allocation13 [shape = 's32[1]{0}', space=sflag, size = 0x4, scoped, tag = 'scoped memory for tpu_custom_call.1']
    #allocation14 [shape = 'u8[4096]{0}', space=vmem, size = 0x1000, scoped, tag = 'output window, operand 0, single buffered']
    %11 = vsyncpa [#allocation7], 0
    %12 = vsyncpa [#allocation10], 0
    %13 = vsyncpa [#allocation13], 0
    %14 = vsyncpa [#allocation8], 0
    // Predicated region
    $region2: #{tpu_custom_call.1} parent=1 // pred_check
      _
    $region3: #{tpu_custom_call.1} parent=1 // pred_check_branch
      %16 = sbr.rel (0) target = $region5
    $region4: #{tpu_custom_call.1} parent=1 // pred_region
      %s18 = ssub.s32 2048, 2048
      %19 = vsyncadd [#allocation7], %s18
      %s20 = sshll.u32 [#allocation6], 4
      %s21 = int_to_ptr.vmem [resolvable:$true] %s20
      %26 = dma.hbm_to_vmem [thread:$0]  %s0, 2048, %s21, [#allocation7], 128, 128, 8
    $region5: #{tpu_custom_call.1} parent=1 // pred_fallthru
      _
    // Predicated region
    $region6: #{tpu_custom_call.1} parent=1 // pred_check
      _
    $region7: #{tpu_custom_call.1} parent=1 // pred_check_branch
      %28 = sbr.rel (0) target = $region9
    $region8: #{tpu_custom_call.1} parent=1 // pred_region
      %s30 = ssub.s32 128, 128
      %31 = vsyncadd [#allocation10], %s30
      %s33 = sshll.u32 [#allocation9], 4
      %s34 = int_to_ptr.vmem [resolvable:$true] %s33
      %36 = dma.hbm_to_vmem [thread:$0]  %s1, 128, %s34, [#allocation10]
    $region9: #{tpu_custom_call.1} parent=1 // pred_fallthru
      _
    // Predicated region
    $region10: #{tpu_custom_call.1} parent=1 // pred_check
      _
    $region11: #{tpu_custom_call.1} parent=1 // pred_check_branch
      %38 = sbr.rel (0) target = $region13
    $region12: #{tpu_custom_call.1} parent=1 // pred_region
      %s40 = ssub.s32 2048, 2048
      %41 = vsyncadd [#allocation10], %s40
      %s42 = sshll.u32 [#allocation11], 4
      %s43 = int_to_ptr.vmem [resolvable:$true] %s42
      %48 = dma.hbm_to_vmem [thread:$0]  %s2, 2048, %s43, [#allocation10], 128, 128, 8
    $region13: #{tpu_custom_call.1} parent=1 // pred_fallthru
      _
    // Predicated region
    $region14: #{tpu_custom_call.1} parent=1 // pred_check
      _
    $region15: #{tpu_custom_call.1} parent=1 // pred_check_branch
      %50 = sbr.rel (0) target = $region17
    $region16: #{tpu_custom_call.1} parent=1 // pred_region
      %s52 = ssub.s32 2048, 2048
      %53 = vsyncadd [#allocation13], %s52
      %s54 = sshll.u32 [#allocation12], 4
      %s55 = int_to_ptr.vmem [resolvable:$true] %s54
      %60 = dma.hbm_to_vmem [thread:$0]  %s3, 2048, %s55, [#allocation13], 128, 128, 8
    $region17: #{tpu_custom_call.1} parent=1 // pred_fallthru
      _
    // Predicated region
    $region18: #{tpu_custom_call.1} parent=1 // pred_check
      _
    $region19: #{tpu_custom_call.1} parent=1 // pred_check_branch
      %62 = sbr.rel (0) target = $region21
    $region20: #{tpu_custom_call.1} parent=1 // pred_region
      _
    $region21: #{tpu_custom_call.1} parent=1 // pred_fallthru
      _
    // Predicated region
    $region22: #{tpu_custom_call.1} parent=1 // pred_check
      _
    $region23: #{tpu_custom_call.1} parent=1 // pred_check_branch
      %64 = sbr.rel (0) target = $region25
    $region24: #{tpu_custom_call.1} parent=1 // pred_region
      _
    $region25: #{tpu_custom_call.1} parent=1 // pred_fallthru
      _
    // Predicated region
    $region26: #{tpu_custom_call.1} parent=1 // pred_check
      _
    $region27: #{tpu_custom_call.1} parent=1 // pred_check_branch
      %66 = sbr.rel (0) target = $region29
    $region28: #{tpu_custom_call.1} parent=1 // pred_region
      %67 = dma.done [#allocation7], 2048
    $region29: #{tpu_custom_call.1} parent=1 // pred_fallthru
      _
    // Predicated region
    $region30: #{tpu_custom_call.1} parent=1 // pred_check
      _
    $region31: #{tpu_custom_call.1} parent=1 // pred_check_branch
      %69 = sbr.rel (0) target = $region33
    $region32: #{tpu_custom_call.1} parent=1 // pred_region
      %70 = dma.done [#allocation10], 128
    $region33: #{tpu_custom_call.1} parent=1 // pred_fallthru
      _
    // Predicated region
    $region34: #{tpu_custom_call.1} parent=1 // pred_check
      _
    $region35: #{tpu_custom_call.1} parent=1 // pred_check_branch
      %72 = sbr.rel (0) target = $region37
    $region36: #{tpu_custom_call.1} parent=1 // pred_region
      %73 = dma.done [#allocation10], 2048
    $region37: #{tpu_custom_call.1} parent=1 // pred_fallthru
      _
    // Predicated region
    $region38: #{tpu_custom_call.1} parent=1 // pred_check
      _
    $region39: #{tpu_custom_call.1} parent=1 // pred_check_branch
      %75 = sbr.rel (0) target = $region41
    $region40: #{tpu_custom_call.1} parent=1 // pred_region
      %76 = dma.done [#allocation13], 2048
    $region41: #{tpu_custom_call.1} parent=1 // pred_fallthru
      _
    %p77 = scmp.eq.s32.totalorder 0, 0
    // Predicated region
    $region42: #{tpu_custom_call.1} parent=1 // pred_check
      %p78 = pneg %p77
    $region43: #{tpu_custom_call.1} parent=1 // pred_check_branch
      %80 = sbr.rel (%p78) target = $region45
    $region44: #{tpu_custom_call.1} parent=1 // pred_region
      %vm81 = vcmask 7168
      %82 = vst.msk [vmem:[#allocation2] sm:$0xff] %vm81, -inf
      %83 = vst.msk [vmem:[#allocation3] sm:$0xff] %vm81, 0.0
      %84 = vst [vmem:[#allocation4] sm:$0xff] 0.0
      %v85 = vld [vmem:[#allocation9] sm:$0xff]
      %v86 = vld [vmem:[#allocation12] sm:$0xff]
      %v87 = vld [vmem:[#allocation12 + $0x8] sm:$0xff]
      %v88 = vld [vmem:[#allocation12 + $0x10] sm:$0xff]
      %v89 = vld [vmem:[#allocation12 + $0x18] sm:$0xff]
      %v90 = vld [vmem:[#allocation12 + $0x20] sm:$0xff]
      %v91 = vld [vmem:[#allocation12 + $0x28] sm:$0xff]
      %v92 = vld [vmem:[#allocation12 + $0x30] sm:$0xff]
      %v93 = vld [vmem:[#allocation12 + $0x38] sm:$0xff]
      %v94 = vld [vmem:[#allocation12 + $0x40] sm:$0xff]
      %v95 = vld [vmem:[#allocation12 + $0x48] sm:$0xff]
      %v96 = vld [vmem:[#allocation12 + $0x50] sm:$0xff]
      %v97 = vld [vmem:[#allocation12 + $0x58] sm:$0xff]
      %v98 = vld [vmem:[#allocation12 + $0x60] sm:$0xff]
      %v99 = vld [vmem:[#allocation12 + $0x68] sm:$0xff]
      %v100 = vld [vmem:[#allocation12 + $0x70] sm:$0xff]
      %v101 = vld [vmem:[#allocation12 + $0x78] sm:$0xff]
      %v102 = vld [vmem:[%s4] sm:$0x1]
      %v104 = vlaneseq
      %v105 = vshrl.u32 %v104, 7
      %v106 = vsub.s32 0, %v105
      %v107 = vrot.slane %v102, %v106
      %109 = vmatprep.subr.mxu0 0.0
      %110 = vmatpush1.msra.mxu0 %v101
      %111 = vmatprep.subr.mxu0 0.0
      %112 = vmatpush1.msra.mxu0 %v100
      %113 = vmatprep.subr.mxu0 0.0
      %114 = vmatpush1.msra.mxu0 %v99
      %115 = vmatprep.subr.mxu0 0.0
      %116 = vmatpush1.msra.mxu0 %v98
      %117 = vmatprep.subr.mxu0 0.0
      %118 = vmatpush1.msra.mxu0 %v97
      %119 = vmatprep.subr.mxu0 0.0
      %120 = vmatpush1.msra.mxu0 %v96
      %121 = vmatprep.subr.mxu0 0.0
      %122 = vmatpush1.msra.mxu0 %v95
      %123 = vmatprep.subr.mxu0 0.0
      %124 = vmatpush1.msra.mxu0 %v94
      %125 = vmatprep.subr.mxu0 0.0
      %126 = vmatpush1.msra.mxu0 %v93
      %127 = vmatprep.subr.mxu0 0.0
      %128 = vmatpush1.msra.mxu0 %v92
      %129 = vmatprep.subr.mxu0 0.0
      %130 = vmatpush1.msra.mxu0 %v91
      %131 = vmatprep.subr.mxu0 0.0
      %132 = vmatpush1.msra.mxu0 %v90
      %133 = vmatprep.subr.mxu0 0.0
      %134 = vmatpush1.msra.mxu0 %v89
      %135 = vmatprep.subr.mxu0 0.0
      %136 = vmatpush1.msra.mxu0 %v88
      %137 = vmatprep.subr.mxu0 0.0
      %138 = vmatpush1.msra.mxu0 %v87
      %139 = vmatprep.subr.mxu0 0.0
      %140 = vmatpush1.msra.mxu0 %v86
      %141 = vmatprep.subr.mxu0 0.0
      %142 = vmatpush2.msra.mxu0 0.0
      %143 = vmatprep.subr.mxu0 0.0
      %144 = vmatpush2.msra.mxu0 0.0
      %145 = vmatprep.subr.mxu0 0.0
      %146 = vmatpush2.msra.mxu0 0.0
      %147 = vmatprep.subr.mxu0 0.0
      %148 = vmatpush2.msra.mxu0 0.0
      %149 = vmatprep.subr.mxu0 0.0
      %150 = vmatpush2.msra.mxu0 0.0
      %151 = vmatprep.subr.mxu0 0.0
      %152 = vmatpush2.msra.mxu0 0.0
      %153 = vmatprep.subr.mxu0 0.0
      %154 = vmatpush2.msra.mxu0 0.0
      %155 = vmatprep.subr.mxu0 0.0
      %156 = vmatpush2.msra.mxu0 0.0
      %157 = vmatprep.subr.mxu0 0.0
      %158 = vmatpush2.msra.mxu0 0.0
      %159 = vmatprep.subr.mxu0 0.0
      %160 = vmatpush2.msra.mxu0 0.0
      %161 = vmatprep.subr.mxu0 0.0
      %162 = vmatpush2.msra.mxu0 0.0
      %163 = vmatprep.subr.mxu0 0.0
      %164 = vmatpush2.msra.mxu0 0.0
      %165 = vmatprep.subr.mxu0 0.0
      %166 = vmatpush2.msra.mxu0 0.0
      %167 = vmatprep.subr.mxu0 0.0
      %168 = vmatpush2.msra.mxu0 0.0
      %169 = vmatprep.subr.mxu0 0.0
      %170 = vmatpush2.msra.mxu0 0.0
      %171 = vmatprep.subr.mxu0 0.0
      %172 = vmatpush2.msra.mxu0 0.0
      %173 = vmatprep.mubr.f32.mxu0 0.0
      %174 = vmatmul.mubr.f32.gmra.mxu0 %v85
      %v175 = vpop.f32.mrf.mxu0
      %v176 = vadd.f32 %v107, %v175
      %v177 = vpop.f32.mrf.mxu0
      %178 = vdwg.mxu0
      %179 = vst [vmem:[#allocation5] sm:$0xff] %v176
    $region45: #{tpu_custom_call.1} parent=1 // pred_fallthru
      _
    %v180 = vld [vmem:[#allocation6] sm:$0xff]
    %v181 = vld [vmem:[#allocation6 + $0x8] sm:$0xff]
    %v182 = vld [vmem:[#allocation6 + $0x10] sm:$0xff]
    %v183 = vld [vmem:[#allocation6 + $0x18] sm:$0xff]
    %v184 = vld [vmem:[#allocation6 + $0x20] sm:$0xff]
    %v185 = vld [vmem:[#allocation6 + $0x28] sm:$0xff]
    %v186 = vld [vmem:[#allocation6 + $0x30] sm:$0xff]
    %v187 = vld [vmem:[#allocation6 + $0x38] sm:$0xff]
    %v188 = vld [vmem:[#allocation6 + $0x40] sm:$0xff]
    %v189 = vld [vmem:[#allocation6 + $0x48] sm:$0xff]
    %v190 = vld [vmem:[#allocation6 + $0x50] sm:$0xff]
    %v191 = vld [vmem:[#allocation6 + $0x58] sm:$0xff]
    %v192 = vld [vmem:[#allocation6 + $0x60] sm:$0xff]
    %v193 = vld [vmem:[#allocation6 + $0x68] sm:$0xff]
    %v194 = vld [vmem:[#allocation6 + $0x70] sm:$0xff]
    %v195 = vld [vmem:[#allocation6 + $0x78] sm:$0xff]
    %v196 = vld [vmem:[#allocation11] sm:$0xff]
    %v197 = vld [vmem:[#allocation11 + $0x8] sm:$0xff]
    %v198 = vld [vmem:[#allocation11 + $0x10] sm:$0xff]
    %v199 = vld [vmem:[#allocation11 + $0x18] sm:$0xff]
    %v200 = vld [vmem:[#allocation11 + $0x20] sm:$0xff]
    %v201 = vld [vmem:[#allocation11 + $0x28] sm:$0xff]
    %v202 = vld [vmem:[#allocation11 + $0x30] sm:$0xff]
    %v203 = vld [vmem:[#allocation11 + $0x38] sm:$0xff]
    %v204 = vld [vmem:[#allocation11 + $0x40] sm:$0xff]
    %v205 = vld [vmem:[#allocation11 + $0x48] sm:$0xff]
    %v206 = vld [vmem:[#allocation11 + $0x50] sm:$0xff]
    %v207 = vld [vmem:[#allocation11 + $0x58] sm:$0xff]
    %v208 = vld [vmem:[#allocation11 + $0x60] sm:$0xff]
    %v209 = vld [vmem:[#allocation11 + $0x68] sm:$0xff]
    %v210 = vld [vmem:[#allocation11 + $0x70] sm:$0xff]
    %v211 = vld [vmem:[#allocation11 + $0x78] sm:$0xff]
    %212 = vmatprep.subr.mxu0 0.0
    %213 = vmatpush1.msra.mxu0 %v211
    %214 = vmatprep.subr.mxu0 0.0
    %215 = vmatpush1.msra.mxu0 %v210
    %216 = vmatprep.subr.mxu0 0.0
    %217 = vmatpush1.msra.mxu0 %v209
    %218 = vmatprep.subr.mxu0 0.0
    %219 = vmatpush1.msra.mxu0 %v208
    %220 = vmatprep.subr.mxu0 0.0
    %221 = vmatpush1.msra.mxu0 %v207
    %222 = vmatprep.subr.mxu0 0.0
    %223 = vmatpush1.msra.mxu0 %v206
    %224 = vmatprep.subr.mxu0 0.0
    %225 = vmatpush1.msra.mxu0 %v205
    %226 = vmatprep.subr.mxu0 0.0
    %227 = vmatpush1.msra.mxu0 %v204
    %228 = vmatprep.subr.mxu0 0.0
    %229 = vmatpush1.msra.mxu0 %v203
    %230 = vmatprep.subr.mxu0 0.0
    %231 = vmatpush1.msra.mxu0 %v202
    %232 = vmatprep.subr.mxu0 0.0
    %233 = vmatpush1.msra.mxu0 %v201
    %234 = vmatprep.subr.mxu0 0.0
    %235 = vmatpush1.msra.mxu0 %v200
    %236 = vmatprep.subr.mxu0 0.0
    %237 = vmatpush1.msra.mxu0 %v199
    %238 = vmatprep.subr.mxu0 0.0
    %239 = vmatpush1.msra.mxu0 %v198
    %240 = vmatprep.subr.mxu0 0.0
    %241 = vmatpush1.msra.mxu0 %v197
    %242 = vmatprep.subr.mxu0 0.0
    %243 = vmatpush1.msra.mxu0 %v196
    %244 = vmatprep.subr.mxu0 0.0
    %245 = vmatpush2.msra.mxu0 0.0
    %246 = vmatprep.subr.mxu0 0.0
    %247 = vmatpush2.msra.mxu0 0.0
    %248 = vmatprep.subr.mxu0 0.0
    %249 = vmatpush2.msra.mxu0 0.0
    %250 = vmatprep.subr.mxu0 0.0
    %251 = vmatpush2.msra.mxu0 0.0
    %252 = vmatprep.subr.mxu0 0.0
    %253 = vmatpush2.msra.mxu0 0.0
    %254 = vmatprep.subr.mxu0 0.0
    %255 = vmatpush2.msra.mxu0 0.0
    %256 = vmatprep.subr.mxu0 0.0
    %257 = vmatpush2.msra.mxu0 0.0
    %258 = vmatprep.subr.mxu0 0.0
    %259 = vmatpush2.msra.mxu0 0.0
    %260 = vmatprep.subr.mxu0 0.0
    %261 = vmatpush2.msra.mxu0 0.0
    %262 = vmatprep.subr.mxu0 0.0
    %263 = vmatpush2.msra.mxu0 0.0
    %264 = vmatprep.subr.mxu0 0.0
    %265 = vmatpush2.msra.mxu0 0.0
    %266 = vmatprep.subr.mxu0 0.0
    %267 = vmatpush2.msra.mxu0 0.0
    %268 = vmatprep.subr.mxu0 0.0
    %269 = vmatpush2.msra.mxu0 0.0
    %270 = vmatprep.subr.mxu0 0.0
    %271 = vmatpush2.msra.mxu0 0.0
    %272 = vmatprep.subr.mxu0 0.0
    %273 = vmatpush2.msra.mxu0 0.0
    %274 = vmatprep.subr.mxu0 0.0
    %275 = vmatpush2.msra.mxu0 0.0
    %276 = vmatprep.mubr.f32.mxu0 0.0
    %277 = vmatmul.mubr.f32.gmra.mxu0 %v180
    %v278 = vpop.f32.mrf.mxu0
    %v279 = vadd.f32 0.0, %v278
    %v280 = vpop.f32.mrf.mxu0
    %281 = vmatprep.mubr.f32.mxu0 0.0
    %282 = vmatmul.mubr.f32.gmra.mxu0 %v181
    %v283 = vpop.f32.mrf.mxu0
    %v284 = vadd.f32 0.0, %v283
    %v285 = vpop.f32.mrf.mxu0
    %286 = vmatprep.mubr.f32.mxu0 0.0
    %287 = vmatmul.mubr.f32.gmra.mxu0 %v182
    %v288 = vpop.f32.mrf.mxu0
    %v289 = vadd.f32 0.0, %v288
    %v290 = vpop.f32.mrf.mxu0
    %291 = vmatprep.mubr.f32.mxu0 0.0
    %292 = vmatmul.mubr.f32.gmra.mxu0 %v183
    %v293 = vpop.f32.mrf.mxu0
    %v294 = vadd.f32 0.0, %v293
    %v295 = vpop.f32.mrf.mxu0
    %296 = vmatprep.mubr.f32.mxu0 0.0
    %297 = vmatmul.mubr.f32.gmra.mxu0 %v184
    %v298 = vpop.f32.mrf.mxu0
    %v299 = vadd.f32 0.0, %v298
    %v300 = vpop.f32.mrf.mxu0
    %301 = vmatprep.mubr.f32.mxu0 0.0
    %302 = vmatmul.mubr.f32.gmra.mxu0 %v185
    %v303 = vpop.f32.mrf.mxu0
    %v304 = vadd.f32 0.0, %v303
    %v305 = vpop.f32.mrf.mxu0
    %306 = vmatprep.mubr.f32.mxu0 0.0
    %307 = vmatmul.mubr.f32.gmra.mxu0 %v186
    %v308 = vpop.f32.mrf.mxu0
    %v309 = vadd.f32 0.0, %v308
    %v310 = vpop.f32.mrf.mxu0
    %311 = vmatprep.mubr.f32.mxu0 0.0
    %312 = vmatmul.mubr.f32.gmra.mxu0 %v187
    %v313 = vpop.f32.mrf.mxu0
    %v314 = vadd.f32 0.0, %v313
    %v315 = vpop.f32.mrf.mxu0
    %316 = vmatprep.mubr.f32.mxu0 0.0
    %317 = vmatmul.mubr.f32.gmra.mxu0 %v188
    %v318 = vpop.f32.mrf.mxu0
    %v319 = vadd.f32 0.0, %v318
    %v320 = vpop.f32.mrf.mxu0
    %321 = vmatprep.mubr.f32.mxu0 0.0
    %322 = vmatmul.mubr.f32.gmra.mxu0 %v189
    %v323 = vpop.f32.mrf.mxu0
    %v324 = vadd.f32 0.0, %v323
    %v325 = vpop.f32.mrf.mxu0
    %326 = vmatprep.mubr.f32.mxu0 0.0
    %327 = vmatmul.mubr.f32.gmra.mxu0 %v190
    %v328 = vpop.f32.mrf.mxu0
    %v329 = vadd.f32 0.0, %v328
    %v330 = vpop.f32.mrf.mxu0
    %331 = vmatprep.mubr.f32.mxu0 0.0
    %332 = vmatmul.mubr.f32.gmra.mxu0 %v191
    %v333 = vpop.f32.mrf.mxu0
    %v334 = vadd.f32 0.0, %v333
    %v335 = vpop.f32.mrf.mxu0
    %336 = vmatprep.mubr.f32.mxu0 0.0
    %337 = vmatmul.mubr.f32.gmra.mxu0 %v192
    %v338 = vpop.f32.mrf.mxu0
    %v339 = vadd.f32 0.0, %v338
    %v340 = vpop.f32.mrf.mxu0
    %341 = vmatprep.mubr.f32.mxu0 0.0
    %342 = vmatmul.mubr.f32.gmra.mxu0 %v193
    %v343 = vpop.f32.mrf.mxu0
    %v344 = vadd.f32 0.0, %v343
    %v345 = vpop.f32.mrf.mxu0
    %346 = vmatprep.mubr.f32.mxu0 0.0
    %347 = vmatmul.mubr.f32.gmra.mxu0 %v194
    %v348 = vpop.f32.mrf.mxu0
    %v349 = vadd.f32 0.0, %v348
    %v350 = vpop.f32.mrf.mxu0
    %351 = vmatprep.mubr.f32.mxu0 0.0
    %352 = vmatmul.mubr.f32.gmra.mxu0 %v195
    %v353 = vpop.f32.mrf.mxu0
    %v354 = vadd.f32 0.0, %v353
    %v355 = vpop.f32.mrf.mxu0
    %356 = vdwg.mxu0
    %v357 = vld [vmem:[#allocation5] sm:$0xff]
    %v358 = vld [vmem:[%s5] sm:$0x1]
    %v360 = vcombine.high %v357, %v357
    %v362 = vunpack.c.l.s4 1966171168
    %v363 = vunpack.c.0.s8 %v362
    %v364 = vlaneseq
    %v365 = vshrl.u32 %v364, 7
    %v366 = vsub.s32 %v363, %v365
    %v367 = vrot.slane %v357, %v366
    %v369 = vunpack.c.l.s4 1966171168
    %v370 = vunpack.c.0.s8 %v369
    %v371 = vlaneseq
    %v372 = vshrl.u32 %v371, 7
    %v373 = vsub.s32 %v370, %v372
    %v374 = vrot.slane %v360, %v373
    %v375 = vcombine.high %v367, %v367
    %v376 = vcombine.high %v374, %v374
    %v378 = vunpack.c.l.s4 1966171168
    %v379 = vunpack.c.0.s8 %v378
    %v380 = vlaneseq
    %v381 = vshrl.u32 %v380, 7
    %v382 = vsub.s32 %v379, %v381
    %v383 = vrot.slane %v367, %v382
    %v385 = vunpack.c.l.s4 1966171168
    %v386 = vunpack.c.0.s8 %v385
    %v387 = vlaneseq
    %v388 = vshrl.u32 %v387, 7
    %v389 = vsub.s32 %v386, %v388
    %v390 = vrot.slane %v374, %v389
    %v392 = vunpack.c.l.s4 1966171168
    %v393 = vunpack.c.0.s8 %v392
    %v394 = vlaneseq
    %v395 = vshrl.u32 %v394, 7
    %v396 = vsub.s32 %v393, %v395
    %v397 = vrot.slane %v375, %v396
    %v399 = vunpack.c.l.s4 1966171168
    %v400 = vunpack.c.0.s8 %v399
    %v401 = vlaneseq
    %v402 = vshrl.u32 %v401, 7
    %v403 = vsub.s32 %v400, %v402
    %v404 = vrot.slane %v376, %v403
    %v405 = vcombine.high %v383, %v383
    %v406 = vcombine.high %v390, %v390
    %v407 = vcombine.high %v397, %v397
    %v408 = vcombine.high %v404, %v404
    %v409 = vlaneseq
    %v410 = vshrl.u32 %v409, 7
    %v411 = vsub.s32 0, %v410
    %v412 = vrot.slane %v383, %v411
    %v413 = vlaneseq
    %v414 = vshrl.u32 %v413, 7
    %v415 = vsub.s32 0, %v414
    %v416 = vrot.slane %v397, %v415
    %v417 = vlaneseq
    %v418 = vshrl.u32 %v417, 7
    %v419 = vsub.s32 0, %v418
    %v420 = vrot.slane %v405, %v419
    %v421 = vlaneseq
    %v422 = vshrl.u32 %v421, 7
    %v423 = vsub.s32 0, %v422
    %v424 = vrot.slane %v407, %v423
    %v425 = vlaneseq
    %v426 = vshrl.u32 %v425, 7
    %v427 = vsub.s32 0, %v426
    %v428 = vrot.slane %v390, %v427
    %v429 = vlaneseq
    %v430 = vshrl.u32 %v429, 7
    %v431 = vsub.s32 0, %v430
    %v432 = vrot.slane %v404, %v431
    %v433 = vlaneseq
    %v434 = vshrl.u32 %v433, 7
    %v435 = vsub.s32 0, %v434
    %v436 = vrot.slane %v406, %v435
    %v437 = vlaneseq
    %v438 = vshrl.u32 %v437, 7
    %v439 = vsub.s32 0, %v438
    %v440 = vrot.slane %v408, %v439
    %v449 = vadd.f32 %v279, %v412
    %v450 = vadd.f32 %v284, %v412
    %v451 = vadd.f32 %v289, %v412
    %v452 = vadd.f32 %v294, %v412
    %v453 = vadd.f32 %v299, %v412
    %v454 = vadd.f32 %v304, %v412
    %v455 = vadd.f32 %v309, %v412
    %v456 = vadd.f32 %v314, %v412
    %v457 = vadd.f32 %v319, %v412
    %v458 = vadd.f32 %v324, %v412
    %v459 = vadd.f32 %v329, %v412
    %v460 = vadd.f32 %v334, %v412
    %v461 = vadd.f32 %v339, %v412
    %v462 = vadd.f32 %v344, %v412
    %v463 = vadd.f32 %v349, %v412
    %v464 = vadd.f32 %v354, %v412
    %v465 = vadd.f32 %v279, %v416
    %v466 = vadd.f32 %v284, %v416
    %v467 = vadd.f32 %v289, %v416
    %v468 = vadd.f32 %v294, %v416
    %v469 = vadd.f32 %v299, %v416
    %v470 = vadd.f32 %v304, %v416
    %v471 = vadd.f32 %v309, %v416
    %v472 = vadd.f32 %v314, %v416
    %v473 = vadd.f32 %v319, %v416
    %v474 = vadd.f32 %v324, %v416
    %v475 = vadd.f32 %v329, %v416
    %v476 = vadd.f32 %v334, %v416
    %v477 = vadd.f32 %v339, %v416
    %v478 = vadd.f32 %v344, %v416
    %v479 = vadd.f32 %v349, %v416
    %v480 = vadd.f32 %v354, %v416
    %v481 = vadd.f32 %v279, %v420
    %v482 = vadd.f32 %v284, %v420
    %v483 = vadd.f32 %v289, %v420
    %v484 = vadd.f32 %v294, %v420
    %v485 = vadd.f32 %v299, %v420
    %v486 = vadd.f32 %v304, %v420
    %v487 = vadd.f32 %v309, %v420
    %v488 = vadd.f32 %v314, %v420
    %v489 = vadd.f32 %v319, %v420
    %v490 = vadd.f32 %v324, %v420
    %v491 = vadd.f32 %v329, %v420
    %v492 = vadd.f32 %v334, %v420
    %v493 = vadd.f32 %v339, %v420
    %v494 = vadd.f32 %v344, %v420
    %v495 = vadd.f32 %v349, %v420
    %v496 = vadd.f32 %v354, %v420
    %v497 = vadd.f32 %v279, %v424
    %v498 = vadd.f32 %v284, %v424
    %v499 = vadd.f32 %v289, %v424
    %v500 = vadd.f32 %v294, %v424
    %v501 = vadd.f32 %v299, %v424
    %v502 = vadd.f32 %v304, %v424
    %v503 = vadd.f32 %v309, %v424
    %v504 = vadd.f32 %v314, %v424
    %v505 = vadd.f32 %v319, %v424
    %v506 = vadd.f32 %v324, %v424
    %v507 = vadd.f32 %v329, %v424
    %v508 = vadd.f32 %v334, %v424
    %v509 = vadd.f32 %v339, %v424
    %v510 = vadd.f32 %v344, %v424
    %v511 = vadd.f32 %v349, %v424
    %v512 = vadd.f32 %v354, %v424
    %v513 = vadd.f32 %v279, %v428
    %v514 = vadd.f32 %v284, %v428
    %v515 = vadd.f32 %v289, %v428
    %v516 = vadd.f32 %v294, %v428
    %v517 = vadd.f32 %v299, %v428
    %v518 = vadd.f32 %v304, %v428
    %v519 = vadd.f32 %v309, %v428
    %v520 = vadd.f32 %v314, %v428
    %v521 = vadd.f32 %v319, %v428
    %v522 = vadd.f32 %v324, %v428
    %v523 = vadd.f32 %v329, %v428
    %v524 = vadd.f32 %v334, %v428
    %v525 = vadd.f32 %v339, %v428
    %v526 = vadd.f32 %v344, %v428
    %v527 = vadd.f32 %v349, %v428
    %v528 = vadd.f32 %v354, %v428
    %v529 = vadd.f32 %v279, %v432
    %v530 = vadd.f32 %v284, %v432
    %v531 = vadd.f32 %v289, %v432
    %v532 = vadd.f32 %v294, %v432
    %v533 = vadd.f32 %v299, %v432
    %v534 = vadd.f32 %v304, %v432
    %v535 = vadd.f32 %v309, %v432
    %v536 = vadd.f32 %v314, %v432
    %v537 = vadd.f32 %v319, %v432
    %v538 = vadd.f32 %v324, %v432
    %v539 = vadd.f32 %v329, %v432
    %v540 = vadd.f32 %v334, %v432
    %v541 = vadd.f32 %v339, %v432
    %v542 = vadd.f32 %v344, %v432
    %v543 = vadd.f32 %v349, %v432
    %v544 = vadd.f32 %v354, %v432
    %v545 = vadd.f32 %v279, %v436
    %v546 = vadd.f32 %v284, %v436
    %v547 = vadd.f32 %v289, %v436
    %v548 = vadd.f32 %v294, %v436
    %v549 = vadd.f32 %v299, %v436
    %v550 = vadd.f32 %v304, %v436
    %v551 = vadd.f32 %v309, %v436
    %v552 = vadd.f32 %v314, %v436
    %v553 = vadd.f32 %v319, %v436
    %v554 = vadd.f32 %v324, %v436
    %v555 = vadd.f32 %v329, %v436
    %v556 = vadd.f32 %v334, %v436
    %v557 = vadd.f32 %v339, %v436
    %v558 = vadd.f32 %v344, %v436
    %v559 = vadd.f32 %v349, %v436
    %v560 = vadd.f32 %v354, %v436
    %v561 = vadd.f32 %v279, %v440
    %v562 = vadd.f32 %v284, %v440
    %v563 = vadd.f32 %v289, %v440
    %v564 = vadd.f32 %v294, %v440
    %v565 = vadd.f32 %v299, %v440
    %v566 = vadd.f32 %v304, %v440
    %v567 = vadd.f32 %v309, %v440
    %v568 = vadd.f32 %v314, %v440
    %v569 = vadd.f32 %v319, %v440
    %v570 = vadd.f32 %v324, %v440
    %v571 = vadd.f32 %v329, %v440
    %v572 = vadd.f32 %v334, %v440
    %v573 = vadd.f32 %v339, %v440
    %v574 = vadd.f32 %v344, %v440
    %v575 = vadd.f32 %v349, %v440
    %v576 = vadd.f32 %v354, %v440
    %v577 = vtanh.pop %v449
    %v578 = vtanh.pop %v450
    %v579 = vtanh.pop %v451
    %v580 = vtanh.pop %v452
    %v581 = vtanh.pop %v453
    %v582 = vtanh.pop %v454
    %v583 = vtanh.pop %v455
    %v584 = vtanh.pop %v456
    %v585 = vtanh.pop %v457
    %v586 = vtanh.pop %v458
    %v587 = vtanh.pop %v459
    %v588 = vtanh.pop %v460
    %v589 = vtanh.pop %v461
    %v590 = vtanh.pop %v462
    %v591 = vtanh.pop %v463
    %v592 = vtanh.pop %v464
    %v593 = vtanh.pop %v465
    %v594 = vtanh.pop %v466
    %v595 = vtanh.pop %v467
    %v596 = vtanh.pop %v468
    %v597 = vtanh.pop %v469
    %v598 = vtanh.pop %v470
    %v599 = vtanh.pop %v471
    %v600 = vtanh.pop %v472
    %v601 = vtanh.pop %v473
    %v602 = vtanh.pop %v474
    %v603 = vtanh.pop %v475
    %v604 = vtanh.pop %v476
    %v605 = vtanh.pop %v477
    %v606 = vtanh.pop %v478
    %v607 = vtanh.pop %v479
    %v608 = vtanh.pop %v480
    %v609 = vtanh.pop %v481
    %v610 = vtanh.pop %v482
    %v611 = vtanh.pop %v483
    %v612 = vtanh.pop %v484
    %v613 = vtanh.pop %v485
    %v614 = vtanh.pop %v486
    %v615 = vtanh.pop %v487
    %v616 = vtanh.pop %v488
    %v617 = vtanh.pop %v489
    %v618 = vtanh.pop %v490
    %v619 = vtanh.pop %v491
    %v620 = vtanh.pop %v492
    %v621 = vtanh.pop %v493
    %v622 = vtanh.pop %v494
    %v623 = vtanh.pop %v495
    %v624 = vtanh.pop %v496
    %v625 = vtanh.pop %v497
    %v626 = vtanh.pop %v498
    %v627 = vtanh.pop %v499
    %v628 = vtanh.pop %v500
    %v629 = vtanh.pop %v501
    %v630 = vtanh.pop %v502
    %v631 = vtanh.pop %v503
    %v632 = vtanh.pop %v504
    %v633 = vtanh.pop %v505
    %v634 = vtanh.pop %v506
    %v635 = vtanh.pop %v507
    %v636 = vtanh.pop %v508
    %v637 = vtanh.pop %v509
    %v638 = vtanh.pop %v510
    %v639 = vtanh.pop %v511
    %v640 = vtanh.pop %v512
    %v641 = vtanh.pop %v513
    %v642 = vtanh.pop %v514
    %v643 = vtanh.pop %v515
    %v644 = vtanh.pop %v516
    %v645 = vtanh.pop %v517
    %v646 = vtanh.pop %v518
    %v647 = vtanh.pop %v519
    %v648 = vtanh.pop %v520
    %v649 = vtanh.pop %v521
    %v650 = vtanh.pop %v522
    %v651 = vtanh.pop %v523
    %v652 = vtanh.pop %v524
    %v653 = vtanh.pop %v525
    %v654 = vtanh.pop %v526
    %v655 = vtanh.pop %v527
    %v656 = vtanh.pop %v528
    %v657 = vtanh.pop %v529
    %v658 = vtanh.pop %v530
    %v659 = vtanh.pop %v531
    %v660 = vtanh.pop %v532
    %v661 = vtanh.pop %v533
    %v662 = vtanh.pop %v534
    %v663 = vtanh.pop %v535
    %v664 = vtanh.pop %v536
    %v665 = vtanh.pop %v537
    %v666 = vtanh.pop %v538
    %v667 = vtanh.pop %v539
    %v668 = vtanh.pop %v540
    %v669 = vtanh.pop %v541
    %v670 = vtanh.pop %v542
    %v671 = vtanh.pop %v543
    %v672 = vtanh.pop %v544
    %v673 = vtanh.pop %v545
    %v674 = vtanh.pop %v546
    %v675 = vtanh.pop %v547
    %v676 = vtanh.pop %v548
    %v677 = vtanh.pop %v549
    %v678 = vtanh.pop %v550
    %v679 = vtanh.pop %v551
    %v680 = vtanh.pop %v552
    %v681 = vtanh.pop %v553
    %v682 = vtanh.pop %v554
    %v683 = vtanh.pop %v555
    %v684 = vtanh.pop %v556
    %v685 = vtanh.pop %v557
    %v686 = vtanh.pop %v558
    %v687 = vtanh.pop %v559
    %v688 = vtanh.pop %v560
    %v689 = vtanh.pop %v561
    %v690 = vtanh.pop %v562
    %v691 = vtanh.pop %v563
    %v692 = vtanh.pop %v564
    %v693 = vtanh.pop %v565
    %v694 = vtanh.pop %v566
    %v695 = vtanh.pop %v567
    %v696 = vtanh.pop %v568
    %v697 = vtanh.pop %v569
    %v698 = vtanh.pop %v570
    %v699 = vtanh.pop %v571
    %v700 = vtanh.pop %v572
    %v701 = vtanh.pop %v573
    %v702 = vtanh.pop %v574
    %v703 = vtanh.pop %v575
    %v704 = vtanh.pop %v576
    %v706 = vlaneseq
    %v707 = vshrl.u32 %v706, 7
    %v708 = vsub.s32 0, %v707
    %v709 = vrot.slane %v358, %v708
    %v711 = vmul.f32 %v577, %v709
    %v712 = vmul.f32 %v578, %v709
    %v713 = vmul.f32 %v579, %v709
    %v714 = vmul.f32 %v580, %v709
    %v715 = vmul.f32 %v581, %v709
    %v716 = vmul.f32 %v582, %v709
    %v717 = vmul.f32 %v583, %v709
    %v718 = vmul.f32 %v584, %v709
    %v719 = vmul.f32 %v585, %v709
    %v720 = vmul.f32 %v586, %v709
    %v721 = vmul.f32 %v587, %v709
    %v722 = vmul.f32 %v588, %v709
    %v723 = vmul.f32 %v589, %v709
    %v724 = vmul.f32 %v590, %v709
    %v725 = vmul.f32 %v591, %v709
    %v726 = vmul.f32 %v592, %v709
    %v727 = vmul.f32 %v593, %v709
    %v728 = vmul.f32 %v594, %v709
    %v729 = vmul.f32 %v595, %v709
    %v730 = vmul.f32 %v596, %v709
    %v731 = vmul.f32 %v597, %v709
    %v732 = vmul.f32 %v598, %v709
    %v733 = vmul.f32 %v599, %v709
    %v734 = vmul.f32 %v600, %v709
    %v735 = vmul.f32 %v601, %v709
    %v736 = vmul.f32 %v602, %v709
    %v737 = vmul.f32 %v603, %v709
    %v738 = vmul.f32 %v604, %v709
    %v739 = vmul.f32 %v605, %v709
    %v740 = vmul.f32 %v606, %v709
    %v741 = vmul.f32 %v607, %v709
    %v742 = vmul.f32 %v608, %v709
    %v743 = vmul.f32 %v609, %v709
    %v744 = vmul.f32 %v610, %v709
    %v745 = vmul.f32 %v611, %v709
    %v746 = vmul.f32 %v612, %v709
    %v747 = vmul.f32 %v613, %v709
    %v748 = vmul.f32 %v614, %v709
    %v749 = vmul.f32 %v615, %v709
    %v750 = vmul.f32 %v616, %v709
    %v751 = vmul.f32 %v617, %v709
    %v752 = vmul.f32 %v618, %v709
    %v753 = vmul.f32 %v619, %v709
    %v754 = vmul.f32 %v620, %v709
    %v755 = vmul.f32 %v621, %v709
    %v756 = vmul.f32 %v622, %v709
    %v757 = vmul.f32 %v623, %v709
    %v758 = vmul.f32 %v624, %v709
    %v759 = vmul.f32 %v625, %v709
    %v760 = vmul.f32 %v626, %v709
    %v761 = vmul.f32 %v627, %v709
    %v762 = vmul.f32 %v628, %v709
    %v763 = vmul.f32 %v629, %v709
    %v764 = vmul.f32 %v630, %v709
    %v765 = vmul.f32 %v631, %v709
    %v766 = vmul.f32 %v632, %v709
    %v767 = vmul.f32 %v633, %v709
    %v768 = vmul.f32 %v634, %v709
    %v769 = vmul.f32 %v635, %v709
    %v770 = vmul.f32 %v636, %v709
    %v771 = vmul.f32 %v637, %v709
    %v772 = vmul.f32 %v638, %v709
    %v773 = vmul.f32 %v639, %v709
    %v774 = vmul.f32 %v640, %v709
    %v775 = vmul.f32 %v641, %v709
    %v776 = vmul.f32 %v642, %v709
    %v777 = vmul.f32 %v643, %v709
    %v778 = vmul.f32 %v644, %v709
    %v779 = vmul.f32 %v645, %v709
    %v780 = vmul.f32 %v646, %v709
    %v781 = vmul.f32 %v647, %v709
    %v782 = vmul.f32 %v648, %v709
    %v783 = vmul.f32 %v649, %v709
    %v784 = vmul.f32 %v650, %v709
    %v785 = vmul.f32 %v651, %v709
    %v786 = vmul.f32 %v652, %v709
    %v787 = vmul.f32 %v653, %v709
    %v788 = vmul.f32 %v654, %v709
    %v789 = vmul.f32 %v655, %v709
    %v790 = vmul.f32 %v656, %v709
    %v791 = vmul.f32 %v657, %v709
    %v792 = vmul.f32 %v658, %v709
    %v793 = vmul.f32 %v659, %v709
    %v794 = vmul.f32 %v660, %v709
    %v795 = vmul.f32 %v661, %v709
    %v796 = vmul.f32 %v662, %v709
    %v797 = vmul.f32 %v663, %v709
    %v798 = vmul.f32 %v664, %v709
    %v799 = vmul.f32 %v665, %v709
    %v800 = vmul.f32 %v666, %v709
    %v801 = vmul.f32 %v667, %v709
    %v802 = vmul.f32 %v668, %v709
    %v803 = vmul.f32 %v669, %v709
    %v804 = vmul.f32 %v670, %v709
    %v805 = vmul.f32 %v671, %v709
    %v806 = vmul.f32 %v672, %v709
    %v807 = vmul.f32 %v673, %v709
    %v808 = vmul.f32 %v674, %v709
    %v809 = vmul.f32 %v675, %v709
    %v810 = vmul.f32 %v676, %v709
    %v811 = vmul.f32 %v677, %v709
    %v812 = vmul.f32 %v678, %v709
    %v813 = vmul.f32 %v679, %v709
    %v814 = vmul.f32 %v680, %v709
    %v815 = vmul.f32 %v681, %v709
    %v816 = vmul.f32 %v682, %v709
    %v817 = vmul.f32 %v683, %v709
    %v818 = vmul.f32 %v684, %v709
    %v819 = vmul.f32 %v685, %v709
    %v820 = vmul.f32 %v686, %v709
    %v821 = vmul.f32 %v687, %v709
    %v822 = vmul.f32 %v688, %v709
    %v823 = vmul.f32 %v689, %v709
    %v824 = vmul.f32 %v690, %v709
    %v825 = vmul.f32 %v691, %v709
    %v826 = vmul.f32 %v692, %v709
    %v827 = vmul.f32 %v693, %v709
    %v828 = vmul.f32 %v694, %v709
    %v829 = vmul.f32 %v695, %v709
    %v830 = vmul.f32 %v696, %v709
    %v831 = vmul.f32 %v697, %v709
    %v832 = vmul.f32 %v698, %v709
    %v833 = vmul.f32 %v699, %v709
    %v834 = vmul.f32 %v700, %v709
    %v835 = vmul.f32 %v701, %v709
    %v836 = vmul.f32 %v702, %v709
    %v837 = vmul.f32 %v703, %v709
    %v838 = vmul.f32 %v704, %v709
    %839 = vadd.xlane.f32.xlu0 %v711
    %v840 = vpop.xlane.xlu0 %839
    %841 = vadd.xlane.f32.xlu0 %v712
    %v842 = vpop.xlane.xlu0 %841
    %843 = vadd.xlane.f32.xlu0 %v713
    %v844 = vpop.xlane.xlu0 %843
    %845 = vadd.xlane.f32.xlu0 %v714
    %v846 = vpop.xlane.xlu0 %845
    %847 = vadd.xlane.f32.xlu0 %v715
    %v848 = vpop.xlane.xlu0 %847
    %849 = vadd.xlane.f32.xlu0 %v716
    %v850 = vpop.xlane.xlu0 %849
    %851 = vadd.xlane.f32.xlu0 %v717
    %v852 = vpop.xlane.xlu0 %851
    %853 = vadd.xlane.f32.xlu0 %v718
    %v854 = vpop.xlane.xlu0 %853
    %855 = vadd.xlane.f32.xlu0 %v719
    %v856 = vpop.xlane.xlu0 %855
    %857 = vadd.xlane.f32.xlu0 %v720
    %v858 = vpop.xlane.xlu0 %857
    %859 = vadd.xlane.f32.xlu0 %v721
    %v860 = vpop.xlane.xlu0 %859
    %861 = vadd.xlane.f32.xlu0 %v722
    %v862 = vpop.xlane.xlu0 %861
    %863 = vadd.xlane.f32.xlu0 %v723
    %v864 = vpop.xlane.xlu0 %863
    %865 = vadd.xlane.f32.xlu0 %v724
    %v866 = vpop.xlane.xlu0 %865
    %867 = vadd.xlane.f32.xlu0 %v725
    %v868 = vpop.xlane.xlu0 %867
    %869 = vadd.xlane.f32.xlu0 %v726
    %v870 = vpop.xlane.xlu0 %869
    %871 = vadd.xlane.f32.xlu0 %v727
    %v872 = vpop.xlane.xlu0 %871
    %873 = vadd.xlane.f32.xlu0 %v728
    %v874 = vpop.xlane.xlu0 %873
    %875 = vadd.xlane.f32.xlu0 %v729
    %v876 = vpop.xlane.xlu0 %875
    %877 = vadd.xlane.f32.xlu0 %v730
    %v878 = vpop.xlane.xlu0 %877
    %879 = vadd.xlane.f32.xlu0 %v731
    %v880 = vpop.xlane.xlu0 %879
    %881 = vadd.xlane.f32.xlu0 %v732
    %v882 = vpop.xlane.xlu0 %881
    %883 = vadd.xlane.f32.xlu0 %v733
    %v884 = vpop.xlane.xlu0 %883
    %885 = vadd.xlane.f32.xlu0 %v734
    %v886 = vpop.xlane.xlu0 %885
    %887 = vadd.xlane.f32.xlu0 %v735
    %v888 = vpop.xlane.xlu0 %887
    %889 = vadd.xlane.f32.xlu0 %v736
    %v890 = vpop.xlane.xlu0 %889
    %891 = vadd.xlane.f32.xlu0 %v737
    %v892 = vpop.xlane.xlu0 %891
    %893 = vadd.xlane.f32.xlu0 %v738
    %v894 = vpop.xlane.xlu0 %893
    %895 = vadd.xlane.f32.xlu0 %v739
    %v896 = vpop.xlane.xlu0 %895
    %897 = vadd.xlane.f32.xlu0 %v740
    %v898 = vpop.xlane.xlu0 %897
    %899 = vadd.xlane.f32.xlu0 %v741
    %v900 = vpop.xlane.xlu0 %899
    %901 = vadd.xlane.f32.xlu0 %v742
    %v902 = vpop.xlane.xlu0 %901
    %903 = vadd.xlane.f32.xlu0 %v743
    %v904 = vpop.xlane.xlu0 %903
    %905 = vadd.xlane.f32.xlu0 %v744
    %v906 = vpop.xlane.xlu0 %905
    %907 = vadd.xlane.f32.xlu0 %v745
    %v908 = vpop.xlane.xlu0 %907
    %909 = vadd.xlane.f32.xlu0 %v746
    %v910 = vpop.xlane.xlu0 %909
    %911 = vadd.xlane.f32.xlu0 %v747
    %v912 = vpop.xlane.xlu0 %911
    %913 = vadd.xlane.f32.xlu0 %v748
    %v914 = vpop.xlane.xlu0 %913
    %915 = vadd.xlane.f32.xlu0 %v749
    %v916 = vpop.xlane.xlu0 %915
    %917 = vadd.xlane.f32.xlu0 %v750
    %v918 = vpop.xlane.xlu0 %917
    %919 = vadd.xlane.f32.xlu0 %v751
    %v920 = vpop.xlane.xlu0 %919
    %921 = vadd.xlane.f32.xlu0 %v752
    %v922 = vpop.xlane.xlu0 %921
    %923 = vadd.xlane.f32.xlu0 %v753
    %v924 = vpop.xlane.xlu0 %923
    %925 = vadd.xlane.f32.xlu0 %v754
    %v926 = vpop.xlane.xlu0 %925
    %927 = vadd.xlane.f32.xlu0 %v755
    %v928 = vpop.xlane.xlu0 %927
    %929 = vadd.xlane.f32.xlu0 %v756
    %v930 = vpop.xlane.xlu0 %929
    %931 = vadd.xlane.f32.xlu0 %v757
    %v932 = vpop.xlane.xlu0 %931
    %933 = vadd.xlane.f32.xlu0 %v758
    %v934 = vpop.xlane.xlu0 %933
    %935 = vadd.xlane.f32.xlu0 %v759
    %v936 = vpop.xlane.xlu0 %935
    %937 = vadd.xlane.f32.xlu0 %v760
    %v938 = vpop.xlane.xlu0 %937
    %939 = vadd.xlane.f32.xlu0 %v761
    %v940 = vpop.xlane.xlu0 %939
    %941 = vadd.xlane.f32.xlu0 %v762
    %v942 = vpop.xlane.xlu0 %941
    %943 = vadd.xlane.f32.xlu0 %v763
    %v944 = vpop.xlane.xlu0 %943
    %945 = vadd.xlane.f32.xlu0 %v764
    %v946 = vpop.xlane.xlu0 %945
    %947 = vadd.xlane.f32.xlu0 %v765
    %v948 = vpop.xlane.xlu0 %947
    %949 = vadd.xlane.f32.xlu0 %v766
    %v950 = vpop.xlane.xlu0 %949
    %951 = vadd.xlane.f32.xlu0 %v767
    %v952 = vpop.xlane.xlu0 %951
    %953 = vadd.xlane.f32.xlu0 %v768
    %v954 = vpop.xlane.xlu0 %953
    %955 = vadd.xlane.f32.xlu0 %v769
    %v956 = vpop.xlane.xlu0 %955
    %957 = vadd.xlane.f32.xlu0 %v770
    %v958 = vpop.xlane.xlu0 %957
    %959 = vadd.xlane.f32.xlu0 %v771
    %v960 = vpop.xlane.xlu0 %959
    %961 = vadd.xlane.f32.xlu0 %v772
    %v962 = vpop.xlane.xlu0 %961
    %963 = vadd.xlane.f32.xlu0 %v773
    %v964 = vpop.xlane.xlu0 %963
    %965 = vadd.xlane.f32.xlu0 %v774
    %v966 = vpop.xlane.xlu0 %965
    %967 = vadd.xlane.f32.xlu0 %v775
    %v968 = vpop.xlane.xlu0 %967
    %969 = vadd.xlane.f32.xlu0 %v776
    %v970 = vpop.xlane.xlu0 %969
    %971 = vadd.xlane.f32.xlu0 %v777
    %v972 = vpop.xlane.xlu0 %971
    %973 = vadd.xlane.f32.xlu0 %v778
    %v974 = vpop.xlane.xlu0 %973
    %975 = vadd.xlane.f32.xlu0 %v779
    %v976 = vpop.xlane.xlu0 %975
    %977 = vadd.xlane.f32.xlu0 %v780
    %v978 = vpop.xlane.xlu0 %977
    %979 = vadd.xlane.f32.xlu0 %v781
    %v980 = vpop.xlane.xlu0 %979
    %981 = vadd.xlane.f32.xlu0 %v782
    %v982 = vpop.xlane.xlu0 %981
    %983 = vadd.xlane.f32.xlu0 %v783
    %v984 = vpop.xlane.xlu0 %983
    %985 = vadd.xlane.f32.xlu0 %v784
    %v986 = vpop.xlane.xlu0 %985
    %987 = vadd.xlane.f32.xlu0 %v785
    %v988 = vpop.xlane.xlu0 %987
    %989 = vadd.xlane.f32.xlu0 %v786
    %v990 = vpop.xlane.xlu0 %989
    %991 = vadd.xlane.f32.xlu0 %v787
    %v992 = vpop.xlane.xlu0 %991
    %993 = vadd.xlane.f32.xlu0 %v788
    %v994 = vpop.xlane.xlu0 %993
    %995 = vadd.xlane.f32.xlu0 %v789
    %v996 = vpop.xlane.xlu0 %995
    %997 = vadd.xlane.f32.xlu0 %v790
    %v998 = vpop.xlane.xlu0 %997
    %999 = vadd.xlane.f32.xlu0 %v791
    %v1000 = vpop.xlane.xlu0 %999
    %1001 = vadd.xlane.f32.xlu0 %v792
    %v1002 = vpop.xlane.xlu0 %1001
    %1003 = vadd.xlane.f32.xlu0 %v793
    %v1004 = vpop.xlane.xlu0 %1003
    %1005 = vadd.xlane.f32.xlu0 %v794
    %v1006 = vpop.xlane.xlu0 %1005
    %1007 = vadd.xlane.f32.xlu0 %v795
    %v1008 = vpop.xlane.xlu0 %1007
    %1009 = vadd.xlane.f32.xlu0 %v796
    %v1010 = vpop.xlane.xlu0 %1009
    %1011 = vadd.xlane.f32.xlu0 %v797
    %v1012 = vpop.xlane.xlu0 %1011
    %1013 = vadd.xlane.f32.xlu0 %v798
    %v1014 = vpop.xlane.xlu0 %1013
    %1015 = vadd.xlane.f32.xlu0 %v799
    %v1016 = vpop.xlane.xlu0 %1015
    %1017 = vadd.xlane.f32.xlu0 %v800
    %v1018 = vpop.xlane.xlu0 %1017
    %1019 = vadd.xlane.f32.xlu0 %v801
    %v1020 = vpop.xlane.xlu0 %1019
    %1021 = vadd.xlane.f32.xlu0 %v802
    %v1022 = vpop.xlane.xlu0 %1021
    %1023 = vadd.xlane.f32.xlu0 %v803
    %v1024 = vpop.xlane.xlu0 %1023
    %1025 = vadd.xlane.f32.xlu0 %v804
    %v1026 = vpop.xlane.xlu0 %1025
    %1027 = vadd.xlane.f32.xlu0 %v805
    %v1028 = vpop.xlane.xlu0 %1027
    %1029 = vadd.xlane.f32.xlu0 %v806
    %v1030 = vpop.xlane.xlu0 %1029
    %1031 = vadd.xlane.f32.xlu0 %v807
    %v1032 = vpop.xlane.xlu0 %1031
    %1033 = vadd.xlane.f32.xlu0 %v808
    %v1034 = vpop.xlane.xlu0 %1033
    %1035 = vadd.xlane.f32.xlu0 %v809
    %v1036 = vpop.xlane.xlu0 %1035
    %1037 = vadd.xlane.f32.xlu0 %v810
    %v1038 = vpop.xlane.xlu0 %1037
    %1039 = vadd.xlane.f32.xlu0 %v811
    %v1040 = vpop.xlane.xlu0 %1039
    %1041 = vadd.xlane.f32.xlu0 %v812
    %v1042 = vpop.xlane.xlu0 %1041
    %1043 = vadd.xlane.f32.xlu0 %v813
    %v1044 = vpop.xlane.xlu0 %1043
    %1045 = vadd.xlane.f32.xlu0 %v814
    %v1046 = vpop.xlane.xlu0 %1045
    %1047 = vadd.xlane.f32.xlu0 %v815
    %v1048 = vpop.xlane.xlu0 %1047
    %1049 = vadd.xlane.f32.xlu0 %v816
    %v1050 = vpop.xlane.xlu0 %1049
    %1051 = vadd.xlane.f32.xlu0 %v817
    %v1052 = vpop.xlane.xlu0 %1051
    %1053 = vadd.xlane.f32.xlu0 %v818
    %v1054 = vpop.xlane.xlu0 %1053
    %1055 = vadd.xlane.f32.xlu0 %v819
    %v1056 = vpop.xlane.xlu0 %1055
    %1057 = vadd.xlane.f32.xlu0 %v820
    %v1058 = vpop.xlane.xlu0 %1057
    %1059 = vadd.xlane.f32.xlu0 %v821
    %v1060 = vpop.xlane.xlu0 %1059
    %1061 = vadd.xlane.f32.xlu0 %v822
    %v1062 = vpop.xlane.xlu0 %1061
    %1063 = vadd.xlane.f32.xlu0 %v823
    %v1064 = vpop.xlane.xlu0 %1063
    %1065 = vadd.xlane.f32.xlu0 %v824
    %v1066 = vpop.xlane.xlu0 %1065
    %1067 = vadd.xlane.f32.xlu0 %v825
    %v1068 = vpop.xlane.xlu0 %1067
    %1069 = vadd.xlane.f32.xlu0 %v826
    %v1070 = vpop.xlane.xlu0 %1069
    %1071 = vadd.xlane.f32.xlu0 %v827
    %v1072 = vpop.xlane.xlu0 %1071
    %1073 = vadd.xlane.f32.xlu0 %v828
    %v1074 = vpop.xlane.xlu0 %1073
    %1075 = vadd.xlane.f32.xlu0 %v829
    %v1076 = vpop.xlane.xlu0 %1075
    %1077 = vadd.xlane.f32.xlu0 %v830
    %v1078 = vpop.xlane.xlu0 %1077
    %1079 = vadd.xlane.f32.xlu0 %v831
    %v1080 = vpop.xlane.xlu0 %1079
    %1081 = vadd.xlane.f32.xlu0 %v832
    %v1082 = vpop.xlane.xlu0 %1081
    %1083 = vadd.xlane.f32.xlu0 %v833
    %v1084 = vpop.xlane.xlu0 %1083
    %1085 = vadd.xlane.f32.xlu0 %v834
    %v1086 = vpop.xlane.xlu0 %1085
    %1087 = vadd.xlane.f32.xlu0 %v835
    %v1088 = vpop.xlane.xlu0 %1087
    %1089 = vadd.xlane.f32.xlu0 %v836
    %v1090 = vpop.xlane.xlu0 %1089
    %1091 = vadd.xlane.f32.xlu0 %v837
    %v1092 = vpop.xlane.xlu0 %1091
    %1093 = vadd.xlane.f32.xlu0 %v838
    %v1094 = vpop.xlane.xlu0 %1093
    %v1095 = vlaneseq
    %v1096 = vand.u32 %v1095, 127
    %s1097 = smul.u32 0, 128
    %v1098 = vstv %s1097
    %v1099 = vadd.s32 %v1096, %v1098
    %vm1100 = vcmp.lt.s32.totalorder %v1099, 8
    %v1229 = vlaneseq
    %v1230 = vshrl.u32 %v1229, 7
    %v1231 = vsub.s32 %v1096, %v1230
    %v1232 = vrot.slane %v840, %v1231
    %v1233 = vadd.s32 %v1096, 4294967288
    %v1234 = vlaneseq
    %v1235 = vshrl.u32 %v1234, 7
    %v1236 = vsub.s32 %v1233, %v1235
    %v1237 = vrot.slane %v842, %v1236
    %vm1238 = vcmask 130112
    %v1239 = vsel %vm1238, %v1237, %v1232
    %v1240 = vadd.s32 %v1096, 4294967280
    %v1241 = vlaneseq
    %v1242 = vshrl.u32 %v1241, 7
    %v1243 = vsub.s32 %v1240, %v1242
    %v1244 = vrot.slane %v844, %v1243
    %vm1245 = vcmask 195712
    %v1246 = vsel %vm1245, %v1244, %v1239
    %v1247 = vadd.s32 %v1096, 4294967272
    %v1248 = vlaneseq
    %v1249 = vshrl.u32 %v1248, 7
    %v1250 = vsub.s32 %v1247, %v1249
    %v1251 = vrot.slane %v846, %v1250
    %vm1252 = vcmask 261312
    %v1253 = vsel %vm1252, %v1251, %v1246
    %v1254 = vadd.s32 %v1096, 4294967264
    %v1255 = vlaneseq
    %v1256 = vshrl.u32 %v1255, 7
    %v1257 = vsub.s32 %v1254, %v1256
    %v1258 = vrot.slane %v848, %v1257
    %vm1259 = vcmask 326912
    %v1260 = vsel %vm1259, %v1258, %v1253
    %v1261 = vadd.s32 %v1096, 4294967256
    %v1262 = vlaneseq
    %v1263 = vshrl.u32 %v1262, 7
    %v1264 = vsub.s32 %v1261, %v1263
    %v1265 = vrot.slane %v850, %v1264
    %vm1266 = vcmask 392512
    %v1267 = vsel %vm1266, %v1265, %v1260
    %v1268 = vadd.s32 %v1096, 4294967248
    %v1269 = vlaneseq
    %v1270 = vshrl.u32 %v1269, 7
    %v1271 = vsub.s32 %v1268, %v1270
    %v1272 = vrot.slane %v852, %v1271
    %vm1273 = vcmask 458112
    %v1274 = vsel %vm1273, %v1272, %v1267
    %v1275 = vadd.s32 %v1096, 4294967240
    %v1276 = vlaneseq
    %v1277 = vshrl.u32 %v1276, 7
    %v1278 = vsub.s32 %v1275, %v1277
    %v1279 = vrot.slane %v854, %v1278
    %vm1280 = vcmask 523712
    %v1281 = vsel %vm1280, %v1279, %v1274
    %v1282 = vadd.s32 %v1096, 4294967232
    %v1283 = vlaneseq
    %v1284 = vshrl.u32 %v1283, 7
    %v1285 = vsub.s32 %v1282, %v1284
    %v1286 = vrot.slane %v856, %v1285
    %vm1287 = vcmask 589312
    %v1288 = vsel %vm1287, %v1286, %v1281
    %v1289 = vadd.s32 %v1096, 4294967224
    %v1290 = vlaneseq
    %v1291 = vshrl.u32 %v1290, 7
    %v1292 = vsub.s32 %v1289, %v1291
    %v1293 = vrot.slane %v858, %v1292
    %vm1294 = vcmask 654912
    %v1295 = vsel %vm1294, %v1293, %v1288
    %v1296 = vadd.s32 %v1096, 4294967216
    %v1297 = vlaneseq
    %v1298 = vshrl.u32 %v1297, 7
    %v1299 = vsub.s32 %v1296, %v1298
    %v1300 = vrot.slane %v860, %v1299
    %vm1301 = vcmask 720512
    %v1302 = vsel %vm1301, %v1300, %v1295
    %v1303 = vadd.s32 %v1096, 4294967208
    %v1304 = vlaneseq
    %v1305 = vshrl.u32 %v1304, 7
    %v1306 = vsub.s32 %v1303, %v1305
    %v1307 = vrot.slane %v862, %v1306
    %vm1308 = vcmask 786112
    %v1309 = vsel %vm1308, %v1307, %v1302
    %v1310 = vadd.s32 %v1096, 4294967200
    %v1311 = vlaneseq
    %v1312 = vshrl.u32 %v1311, 7
    %v1313 = vsub.s32 %v1310, %v1312
    %v1314 = vrot.slane %v864, %v1313
    %vm1315 = vcmask 851712
    %v1316 = vsel %vm1315, %v1314, %v1309
    %v1317 = vadd.s32 %v1096, 4294967192
    %v1318 = vlaneseq
    %v1319 = vshrl.u32 %v1318, 7
    %v1320 = vsub.s32 %v1317, %v1319
    %v1321 = vrot.slane %v866, %v1320
    %vm1322 = vcmask 917312
    %v1323 = vsel %vm1322, %v1321, %v1316
    %v1324 = vadd.s32 %v1096, 4294967184
    %v1325 = vlaneseq
    %v1326 = vshrl.u32 %v1325, 7
    %v1327 = vsub.s32 %v1324, %v1326
    %v1328 = vrot.slane %v868, %v1327
    %vm1329 = vcmask 982912
    %v1330 = vsel %vm1329, %v1328, %v1323
    %v1331 = vadd.s32 %v1096, 4294967176
    %v1332 = vlaneseq
    %v1333 = vshrl.u32 %v1332, 7
    %v1334 = vsub.s32 %v1331, %v1333
    %v1335 = vrot.slane %v870, %v1334
    %vm1336 = vcmask 1048512
    %v1337 = vsel %vm1336, %v1335, %v1330
    %v1338 = vlaneseq
    %v1339 = vshrl.u32 %v1338, 7
    %v1340 = vsub.s32 %v1096, %v1339
    %v1341 = vrot.slane %v872, %v1340
    %v1342 = vlaneseq
    %v1343 = vshrl.u32 %v1342, 7
    %v1344 = vsub.s32 %v1233, %v1343
    %v1345 = vrot.slane %v874, %v1344
    %v1346 = vsel %vm1238, %v1345, %v1341
    %v1347 = vlaneseq
    %v1348 = vshrl.u32 %v1347, 7
    %v1349 = vsub.s32 %v1240, %v1348
    %v1350 = vrot.slane %v876, %v1349
    %v1351 = vsel %vm1245, %v1350, %v1346
    %v1352 = vlaneseq
    %v1353 = vshrl.u32 %v1352, 7
    %v1354 = vsub.s32 %v1247, %v1353
    %v1355 = vrot.slane %v878, %v1354
    %v1356 = vsel %vm1252, %v1355, %v1351
    %v1357 = vlaneseq
    %v1358 = vshrl.u32 %v1357, 7
    %v1359 = vsub.s32 %v1254, %v1358
    %v1360 = vrot.slane %v880, %v1359
    %v1361 = vsel %vm1259, %v1360, %v1356
    %v1362 = vlaneseq
    %v1363 = vshrl.u32 %v1362, 7
    %v1364 = vsub.s32 %v1261, %v1363
    %v1365 = vrot.slane %v882, %v1364
    %v1366 = vsel %vm1266, %v1365, %v1361
    %v1367 = vlaneseq
    %v1368 = vshrl.u32 %v1367, 7
    %v1369 = vsub.s32 %v1268, %v1368
    %v1370 = vrot.slane %v884, %v1369
    %v1371 = vsel %vm1273, %v1370, %v1366
    %v1372 = vlaneseq
    %v1373 = vshrl.u32 %v1372, 7
    %v1374 = vsub.s32 %v1275, %v1373
    %v1375 = vrot.slane %v886, %v1374
    %v1376 = vsel %vm1280, %v1375, %v1371
    %v1377 = vlaneseq
    %v1378 = vshrl.u32 %v1377, 7
    %v1379 = vsub.s32 %v1282, %v1378
    %v1380 = vrot.slane %v888, %v1379
    %v1381 = vsel %vm1287, %v1380, %v1376
    %v1382 = vlaneseq
    %v1383 = vshrl.u32 %v1382, 7
    %v1384 = vsub.s32 %v1289, %v1383
    %v1385 = vrot.slane %v890, %v1384
    %v1386 = vsel %vm1294, %v1385, %v1381
    %v1387 = vlaneseq
    %v1388 = vshrl.u32 %v1387, 7
    %v1389 = vsub.s32 %v1296, %v1388
    %v1390 = vrot.slane %v892, %v1389
    %v1391 = vsel %vm1301, %v1390, %v1386
    %v1392 = vlaneseq
    %v1393 = vshrl.u32 %v1392, 7
    %v1394 = vsub.s32 %v1303, %v1393
    %v1395 = vrot.slane %v894, %v1394
    %v1396 = vsel %vm1308, %v1395, %v1391
    %v1397 = vlaneseq
    %v1398 = vshrl.u32 %v1397, 7
    %v1399 = vsub.s32 %v1310, %v1398
    %v1400 = vrot.slane %v896, %v1399
    %v1401 = vsel %vm1315, %v1400, %v1396
    %v1402 = vlaneseq
    %v1403 = vshrl.u32 %v1402, 7
    %v1404 = vsub.s32 %v1317, %v1403
    %v1405 = vrot.slane %v898, %v1404
    %v1406 = vsel %vm1322, %v1405, %v1401
    %v1407 = vlaneseq
    %v1408 = vshrl.u32 %v1407, 7
    %v1409 = vsub.s32 %v1324, %v1408
    %v1410 = vrot.slane %v900, %v1409
    %v1411 = vsel %vm1329, %v1410, %v1406
    %v1412 = vlaneseq
    %v1413 = vshrl.u32 %v1412, 7
    %v1414 = vsub.s32 %v1331, %v1413
    %v1415 = vrot.slane %v902, %v1414
    %v1416 = vsel %vm1336, %v1415, %v1411
    %v1417 = vlaneseq
    %v1418 = vshrl.u32 %v1417, 7
    %v1419 = vsub.s32 %v1096, %v1418
    %v1420 = vrot.slane %v904, %v1419
    %v1421 = vlaneseq
    %v1422 = vshrl.u32 %v1421, 7
    %v1423 = vsub.s32 %v1233, %v1422
    %v1424 = vrot.slane %v906, %v1423
    %v1425 = vsel %vm1238, %v1424, %v1420
    %v1426 = vlaneseq
    %v1427 = vshrl.u32 %v1426, 7
    %v1428 = vsub.s32 %v1240, %v1427
    %v1429 = vrot.slane %v908, %v1428
    %v1430 = vsel %vm1245, %v1429, %v1425
    %v1431 = vlaneseq
    %v1432 = vshrl.u32 %v1431, 7
    %v1433 = vsub.s32 %v1247, %v1432
    %v1434 = vrot.slane %v910, %v1433
    %v1435 = vsel %vm1252, %v1434, %v1430
    %v1436 = vlaneseq
    %v1437 = vshrl.u32 %v1436, 7
    %v1438 = vsub.s32 %v1254, %v1437
    %v1439 = vrot.slane %v912, %v1438
    %v1440 = vsel %vm1259, %v1439, %v1435
    %v1441 = vlaneseq
    %v1442 = vshrl.u32 %v1441, 7
    %v1443 = vsub.s32 %v1261, %v1442
    %v1444 = vrot.slane %v914, %v1443
    %v1445 = vsel %vm1266, %v1444, %v1440
    %v1446 = vlaneseq
    %v1447 = vshrl.u32 %v1446, 7
    %v1448 = vsub.s32 %v1268, %v1447
    %v1449 = vrot.slane %v916, %v1448
    %v1450 = vsel %vm1273, %v1449, %v1445
    %v1451 = vlaneseq
    %v1452 = vshrl.u32 %v1451, 7
    %v1453 = vsub.s32 %v1275, %v1452
    %v1454 = vrot.slane %v918, %v1453
    %v1455 = vsel %vm1280, %v1454, %v1450
    %v1456 = vlaneseq
    %v1457 = vshrl.u32 %v1456, 7
    %v1458 = vsub.s32 %v1282, %v1457
    %v1459 = vrot.slane %v920, %v1458
    %v1460 = vsel %vm1287, %v1459, %v1455
    %v1461 = vlaneseq
    %v1462 = vshrl.u32 %v1461, 7
    %v1463 = vsub.s32 %v1289, %v1462
    %v1464 = vrot.slane %v922, %v1463
    %v1465 = vsel %vm1294, %v1464, %v1460
    %v1466 = vlaneseq
    %v1467 = vshrl.u32 %v1466, 7
    %v1468 = vsub.s32 %v1296, %v1467
    %v1469 = vrot.slane %v924, %v1468
    %v1470 = vsel %vm1301, %v1469, %v1465
    %v1471 = vlaneseq
    %v1472 = vshrl.u32 %v1471, 7
    %v1473 = vsub.s32 %v1303, %v1472
    %v1474 = vrot.slane %v926, %v1473
    %v1475 = vsel %vm1308, %v1474, %v1470
    %v1476 = vlaneseq
    %v1477 = vshrl.u32 %v1476, 7
    %v1478 = vsub.s32 %v1310, %v1477
    %v1479 = vrot.slane %v928, %v1478
    %v1480 = vsel %vm1315, %v1479, %v1475
    %v1481 = vlaneseq
    %v1482 = vshrl.u32 %v1481, 7
    %v1483 = vsub.s32 %v1317, %v1482
    %v1484 = vrot.slane %v930, %v1483
    %v1485 = vsel %vm1322, %v1484, %v1480
    %v1486 = vlaneseq
    %v1487 = vshrl.u32 %v1486, 7
    %v1488 = vsub.s32 %v1324, %v1487
    %v1489 = vrot.slane %v932, %v1488
    %v1490 = vsel %vm1329, %v1489, %v1485
    %v1491 = vlaneseq
    %v1492 = vshrl.u32 %v1491, 7
    %v1493 = vsub.s32 %v1331, %v1492
    %v1494 = vrot.slane %v934, %v1493
    %v1495 = vsel %vm1336, %v1494, %v1490
    %v1496 = vlaneseq
    %v1497 = vshrl.u32 %v1496, 7
    %v1498 = vsub.s32 %v1096, %v1497
    %v1499 = vrot.slane %v936, %v1498
    %v1500 = vlaneseq
    %v1501 = vshrl.u32 %v1500, 7
    %v1502 = vsub.s32 %v1233, %v1501
    %v1503 = vrot.slane %v938, %v1502
    %v1504 = vsel %vm1238, %v1503, %v1499
    %v1505 = vlaneseq
    %v1506 = vshrl.u32 %v1505, 7
    %v1507 = vsub.s32 %v1240, %v1506
    %v1508 = vrot.slane %v940, %v1507
    %v1509 = vsel %vm1245, %v1508, %v1504
    %v1510 = vlaneseq
    %v1511 = vshrl.u32 %v1510, 7
    %v1512 = vsub.s32 %v1247, %v1511
    %v1513 = vrot.slane %v942, %v1512
    %v1514 = vsel %vm1252, %v1513, %v1509
    %v1515 = vlaneseq
    %v1516 = vshrl.u32 %v1515, 7
    %v1517 = vsub.s32 %v1254, %v1516
    %v1518 = vrot.slane %v944, %v1517
    %v1519 = vsel %vm1259, %v1518, %v1514
    %v1520 = vlaneseq
    %v1521 = vshrl.u32 %v1520, 7
    %v1522 = vsub.s32 %v1261, %v1521
    %v1523 = vrot.slane %v946, %v1522
    %v1524 = vsel %vm1266, %v1523, %v1519
    %v1525 = vlaneseq
    %v1526 = vshrl.u32 %v1525, 7
    %v1527 = vsub.s32 %v1268, %v1526
    %v1528 = vrot.slane %v948, %v1527
    %v1529 = vsel %vm1273, %v1528, %v1524
    %v1530 = vlaneseq
    %v1531 = vshrl.u32 %v1530, 7
    %v1532 = vsub.s32 %v1275, %v1531
    %v1533 = vrot.slane %v950, %v1532
    %v1534 = vsel %vm1280, %v1533, %v1529
    %v1535 = vlaneseq
    %v1536 = vshrl.u32 %v1535, 7
    %v1537 = vsub.s32 %v1282, %v1536
    %v1538 = vrot.slane %v952, %v1537
    %v1539 = vsel %vm1287, %v1538, %v1534
    %v1540 = vlaneseq
    %v1541 = vshrl.u32 %v1540, 7
    %v1542 = vsub.s32 %v1289, %v1541
    %v1543 = vrot.slane %v954, %v1542
    %v1544 = vsel %vm1294, %v1543, %v1539
    %v1545 = vlaneseq
    %v1546 = vshrl.u32 %v1545, 7
    %v1547 = vsub.s32 %v1296, %v1546
    %v1548 = vrot.slane %v956, %v1547
    %v1549 = vsel %vm1301, %v1548, %v1544
    %v1550 = vlaneseq
    %v1551 = vshrl.u32 %v1550, 7
    %v1552 = vsub.s32 %v1303, %v1551
    %v1553 = vrot.slane %v958, %v1552
    %v1554 = vsel %vm1308, %v1553, %v1549
    %v1555 = vlaneseq
    %v1556 = vshrl.u32 %v1555, 7
    %v1557 = vsub.s32 %v1310, %v1556
    %v1558 = vrot.slane %v960, %v1557
    %v1559 = vsel %vm1315, %v1558, %v1554
    %v1560 = vlaneseq
    %v1561 = vshrl.u32 %v1560, 7
    %v1562 = vsub.s32 %v1317, %v1561
    %v1563 = vrot.slane %v962, %v1562
    %v1564 = vsel %vm1322, %v1563, %v1559
    %v1565 = vlaneseq
    %v1566 = vshrl.u32 %v1565, 7
    %v1567 = vsub.s32 %v1324, %v1566
    %v1568 = vrot.slane %v964, %v1567
    %v1569 = vsel %vm1329, %v1568, %v1564
    %v1570 = vlaneseq
    %v1571 = vshrl.u32 %v1570, 7
    %v1572 = vsub.s32 %v1331, %v1571
    %v1573 = vrot.slane %v966, %v1572
    %v1574 = vsel %vm1336, %v1573, %v1569
    %v1575 = vlaneseq
    %v1576 = vshrl.u32 %v1575, 7
    %v1577 = vsub.s32 %v1096, %v1576
    %v1578 = vrot.slane %v968, %v1577
    %v1579 = vlaneseq
    %v1580 = vshrl.u32 %v1579, 7
    %v1581 = vsub.s32 %v1233, %v1580
    %v1582 = vrot.slane %v970, %v1581
    %v1583 = vsel %vm1238, %v1582, %v1578
    %v1584 = vlaneseq
    %v1585 = vshrl.u32 %v1584, 7
    %v1586 = vsub.s32 %v1240, %v1585
    %v1587 = vrot.slane %v972, %v1586
    %v1588 = vsel %vm1245, %v1587, %v1583
    %v1589 = vlaneseq
    %v1590 = vshrl.u32 %v1589, 7
    %v1591 = vsub.s32 %v1247, %v1590
    %v1592 = vrot.slane %v974, %v1591
    %v1593 = vsel %vm1252, %v1592, %v1588
    %v1594 = vlaneseq
    %v1595 = vshrl.u32 %v1594, 7
    %v1596 = vsub.s32 %v1254, %v1595
    %v1597 = vrot.slane %v976, %v1596
    %v1598 = vsel %vm1259, %v1597, %v1593
    %v1599 = vlaneseq
    %v1600 = vshrl.u32 %v1599, 7
    %v1601 = vsub.s32 %v1261, %v1600
    %v1602 = vrot.slane %v978, %v1601
    %v1603 = vsel %vm1266, %v1602, %v1598
    %v1604 = vlaneseq
    %v1605 = vshrl.u32 %v1604, 7
    %v1606 = vsub.s32 %v1268, %v1605
    %v1607 = vrot.slane %v980, %v1606
    %v1608 = vsel %vm1273, %v1607, %v1603
    %v1609 = vlaneseq
    %v1610 = vshrl.u32 %v1609, 7
    %v1611 = vsub.s32 %v1275, %v1610
    %v1612 = vrot.slane %v982, %v1611
    %v1613 = vsel %vm1280, %v1612, %v1608
    %v1614 = vlaneseq
    %v1615 = vshrl.u32 %v1614, 7
    %v1616 = vsub.s32 %v1282, %v1615
    %v1617 = vrot.slane %v984, %v1616
    %v1618 = vsel %vm1287, %v1617, %v1613
    %v1619 = vlaneseq
    %v1620 = vshrl.u32 %v1619, 7
    %v1621 = vsub.s32 %v1289, %v1620
    %v1622 = vrot.slane %v986, %v1621
    %v1623 = vsel %vm1294, %v1622, %v1618
    %v1624 = vlaneseq
    %v1625 = vshrl.u32 %v1624, 7
    %v1626 = vsub.s32 %v1296, %v1625
    %v1627 = vrot.slane %v988, %v1626
    %v1628 = vsel %vm1301, %v1627, %v1623
    %v1629 = vlaneseq
    %v1630 = vshrl.u32 %v1629, 7
    %v1631 = vsub.s32 %v1303, %v1630
    %v1632 = vrot.slane %v990, %v1631
    %v1633 = vsel %vm1308, %v1632, %v1628
    %v1634 = vlaneseq
    %v1635 = vshrl.u32 %v1634, 7
    %v1636 = vsub.s32 %v1310, %v1635
    %v1637 = vrot.slane %v992, %v1636
    %v1638 = vsel %vm1315, %v1637, %v1633
    %v1639 = vlaneseq
    %v1640 = vshrl.u32 %v1639, 7
    %v1641 = vsub.s32 %v1317, %v1640
    %v1642 = vrot.slane %v994, %v1641
    %v1643 = vsel %vm1322, %v1642, %v1638
    %v1644 = vlaneseq
    %v1645 = vshrl.u32 %v1644, 7
    %v1646 = vsub.s32 %v1324, %v1645
    %v1647 = vrot.slane %v996, %v1646
    %v1648 = vsel %vm1329, %v1647, %v1643
    %v1649 = vlaneseq
    %v1650 = vshrl.u32 %v1649, 7
    %v1651 = vsub.s32 %v1331, %v1650
    %v1652 = vrot.slane %v998, %v1651
    %v1653 = vsel %vm1336, %v1652, %v1648
    %v1654 = vlaneseq
    %v1655 = vshrl.u32 %v1654, 7
    %v1656 = vsub.s32 %v1096, %v1655
    %v1657 = vrot.slane %v1000, %v1656
    %v1658 = vlaneseq
    %v1659 = vshrl.u32 %v1658, 7
    %v1660 = vsub.s32 %v1233, %v1659
    %v1661 = vrot.slane %v1002, %v1660
    %v1662 = vsel %vm1238, %v1661, %v1657
    %v1663 = vlaneseq
    %v1664 = vshrl.u32 %v1663, 7
    %v1665 = vsub.s32 %v1240, %v1664
    %v1666 = vrot.slane %v1004, %v1665
    %v1667 = vsel %vm1245, %v1666, %v1662
    %v1668 = vlaneseq
    %v1669 = vshrl.u32 %v1668, 7
    %v1670 = vsub.s32 %v1247, %v1669
    %v1671 = vrot.slane %v1006, %v1670
    %v1672 = vsel %vm1252, %v1671, %v1667
    %v1673 = vlaneseq
    %v1674 = vshrl.u32 %v1673, 7
    %v1675 = vsub.s32 %v1254, %v1674
    %v1676 = vrot.slane %v1008, %v1675
    %v1677 = vsel %vm1259, %v1676, %v1672
    %v1678 = vlaneseq
    %v1679 = vshrl.u32 %v1678, 7
    %v1680 = vsub.s32 %v1261, %v1679
    %v1681 = vrot.slane %v1010, %v1680
    %v1682 = vsel %vm1266, %v1681, %v1677
    %v1683 = vlaneseq
    %v1684 = vshrl.u32 %v1683, 7
    %v1685 = vsub.s32 %v1268, %v1684
    %v1686 = vrot.slane %v1012, %v1685
    %v1687 = vsel %vm1273, %v1686, %v1682
    %v1688 = vlaneseq
    %v1689 = vshrl.u32 %v1688, 7
    %v1690 = vsub.s32 %v1275, %v1689
    %v1691 = vrot.slane %v1014, %v1690
    %v1692 = vsel %vm1280, %v1691, %v1687
    %v1693 = vlaneseq
    %v1694 = vshrl.u32 %v1693, 7
    %v1695 = vsub.s32 %v1282, %v1694
    %v1696 = vrot.slane %v1016, %v1695
    %v1697 = vsel %vm1287, %v1696, %v1692
    %v1698 = vlaneseq
    %v1699 = vshrl.u32 %v1698, 7
    %v1700 = vsub.s32 %v1289, %v1699
    %v1701 = vrot.slane %v1018, %v1700
    %v1702 = vsel %vm1294, %v1701, %v1697
    %v1703 = vlaneseq
    %v1704 = vshrl.u32 %v1703, 7
    %v1705 = vsub.s32 %v1296, %v1704
    %v1706 = vrot.slane %v1020, %v1705
    %v1707 = vsel %vm1301, %v1706, %v1702
    %v1708 = vlaneseq
    %v1709 = vshrl.u32 %v1708, 7
    %v1710 = vsub.s32 %v1303, %v1709
    %v1711 = vrot.slane %v1022, %v1710
    %v1712 = vsel %vm1308, %v1711, %v1707
    %v1713 = vlaneseq
    %v1714 = vshrl.u32 %v1713, 7
    %v1715 = vsub.s32 %v1310, %v1714
    %v1716 = vrot.slane %v1024, %v1715
    %v1717 = vsel %vm1315, %v1716, %v1712
    %v1718 = vlaneseq
    %v1719 = vshrl.u32 %v1718, 7
    %v1720 = vsub.s32 %v1317, %v1719
    %v1721 = vrot.slane %v1026, %v1720
    %v1722 = vsel %vm1322, %v1721, %v1717
    %v1723 = vlaneseq
    %v1724 = vshrl.u32 %v1723, 7
    %v1725 = vsub.s32 %v1324, %v1724
    %v1726 = vrot.slane %v1028, %v1725
    %v1727 = vsel %vm1329, %v1726, %v1722
    %v1728 = vlaneseq
    %v1729 = vshrl.u32 %v1728, 7
    %v1730 = vsub.s32 %v1331, %v1729
    %v1731 = vrot.slane %v1030, %v1730
    %v1732 = vsel %vm1336, %v1731, %v1727
    %v1733 = vlaneseq
    %v1734 = vshrl.u32 %v1733, 7
    %v1735 = vsub.s32 %v1096, %v1734
    %v1736 = vrot.slane %v1032, %v1735
    %v1737 = vlaneseq
    %v1738 = vshrl.u32 %v1737, 7
    %v1739 = vsub.s32 %v1233, %v1738
    %v1740 = vrot.slane %v1034, %v1739
    %v1741 = vsel %vm1238, %v1740, %v1736
    %v1742 = vlaneseq
    %v1743 = vshrl.u32 %v1742, 7
    %v1744 = vsub.s32 %v1240, %v1743
    %v1745 = vrot.slane %v1036, %v1744
    %v1746 = vsel %vm1245, %v1745, %v1741
    %v1747 = vlaneseq
    %v1748 = vshrl.u32 %v1747, 7
    %v1749 = vsub.s32 %v1247, %v1748
    %v1750 = vrot.slane %v1038, %v1749
    %v1751 = vsel %vm1252, %v1750, %v1746
    %v1752 = vlaneseq
    %v1753 = vshrl.u32 %v1752, 7
    %v1754 = vsub.s32 %v1254, %v1753
    %v1755 = vrot.slane %v1040, %v1754
    %v1756 = vsel %vm1259, %v1755, %v1751
    %v1757 = vlaneseq
    %v1758 = vshrl.u32 %v1757, 7
    %v1759 = vsub.s32 %v1261, %v1758
    %v1760 = vrot.slane %v1042, %v1759
    %v1761 = vsel %vm1266, %v1760, %v1756
    %v1762 = vlaneseq
    %v1763 = vshrl.u32 %v1762, 7
    %v1764 = vsub.s32 %v1268, %v1763
    %v1765 = vrot.slane %v1044, %v1764
    %v1766 = vsel %vm1273, %v1765, %v1761
    %v1767 = vlaneseq
    %v1768 = vshrl.u32 %v1767, 7
    %v1769 = vsub.s32 %v1275, %v1768
    %v1770 = vrot.slane %v1046, %v1769
    %v1771 = vsel %vm1280, %v1770, %v1766
    %v1772 = vlaneseq
    %v1773 = vshrl.u32 %v1772, 7
    %v1774 = vsub.s32 %v1282, %v1773
    %v1775 = vrot.slane %v1048, %v1774
    %v1776 = vsel %vm1287, %v1775, %v1771
    %v1777 = vlaneseq
    %v1778 = vshrl.u32 %v1777, 7
    %v1779 = vsub.s32 %v1289, %v1778
    %v1780 = vrot.slane %v1050, %v1779
    %v1781 = vsel %vm1294, %v1780, %v1776
    %v1782 = vlaneseq
    %v1783 = vshrl.u32 %v1782, 7
    %v1784 = vsub.s32 %v1296, %v1783
    %v1785 = vrot.slane %v1052, %v1784
    %v1786 = vsel %vm1301, %v1785, %v1781
    %v1787 = vlaneseq
    %v1788 = vshrl.u32 %v1787, 7
    %v1789 = vsub.s32 %v1303, %v1788
    %v1790 = vrot.slane %v1054, %v1789
    %v1791 = vsel %vm1308, %v1790, %v1786
    %v1792 = vlaneseq
    %v1793 = vshrl.u32 %v1792, 7
    %v1794 = vsub.s32 %v1310, %v1793
    %v1795 = vrot.slane %v1056, %v1794
    %v1796 = vsel %vm1315, %v1795, %v1791
    %v1797 = vlaneseq
    %v1798 = vshrl.u32 %v1797, 7
    %v1799 = vsub.s32 %v1317, %v1798
    %v1800 = vrot.slane %v1058, %v1799
    %v1801 = vsel %vm1322, %v1800, %v1796
    %v1802 = vlaneseq
    %v1803 = vshrl.u32 %v1802, 7
    %v1804 = vsub.s32 %v1324, %v1803
    %v1805 = vrot.slane %v1060, %v1804
    %v1806 = vsel %vm1329, %v1805, %v1801
    %v1807 = vlaneseq
    %v1808 = vshrl.u32 %v1807, 7
    %v1809 = vsub.s32 %v1331, %v1808
    %v1810 = vrot.slane %v1062, %v1809
    %v1811 = vsel %vm1336, %v1810, %v1806
    %v1812 = vlaneseq
    %v1813 = vshrl.u32 %v1812, 7
    %v1814 = vsub.s32 %v1096, %v1813
    %v1815 = vrot.slane %v1064, %v1814
    %v1816 = vlaneseq
    %v1817 = vshrl.u32 %v1816, 7
    %v1818 = vsub.s32 %v1233, %v1817
    %v1819 = vrot.slane %v1066, %v1818
    %v1820 = vsel %vm1238, %v1819, %v1815
    %v1821 = vlaneseq
    %v1822 = vshrl.u32 %v1821, 7
    %v1823 = vsub.s32 %v1240, %v1822
    %v1824 = vrot.slane %v1068, %v1823
    %v1825 = vsel %vm1245, %v1824, %v1820
    %v1826 = vlaneseq
    %v1827 = vshrl.u32 %v1826, 7
    %v1828 = vsub.s32 %v1247, %v1827
    %v1829 = vrot.slane %v1070, %v1828
    %v1830 = vsel %vm1252, %v1829, %v1825
    %v1831 = vlaneseq
    %v1832 = vshrl.u32 %v1831, 7
    %v1833 = vsub.s32 %v1254, %v1832
    %v1834 = vrot.slane %v1072, %v1833
    %v1835 = vsel %vm1259, %v1834, %v1830
    %v1836 = vlaneseq
    %v1837 = vshrl.u32 %v1836, 7
    %v1838 = vsub.s32 %v1261, %v1837
    %v1839 = vrot.slane %v1074, %v1838
    %v1840 = vsel %vm1266, %v1839, %v1835
    %v1841 = vlaneseq
    %v1842 = vshrl.u32 %v1841, 7
    %v1843 = vsub.s32 %v1268, %v1842
    %v1844 = vrot.slane %v1076, %v1843
    %v1845 = vsel %vm1273, %v1844, %v1840
    %v1846 = vlaneseq
    %v1847 = vshrl.u32 %v1846, 7
    %v1848 = vsub.s32 %v1275, %v1847
    %v1849 = vrot.slane %v1078, %v1848
    %v1850 = vsel %vm1280, %v1849, %v1845
    %v1851 = vlaneseq
    %v1852 = vshrl.u32 %v1851, 7
    %v1853 = vsub.s32 %v1282, %v1852
    %v1854 = vrot.slane %v1080, %v1853
    %v1855 = vsel %vm1287, %v1854, %v1850
    %v1856 = vlaneseq
    %v1857 = vshrl.u32 %v1856, 7
    %v1858 = vsub.s32 %v1289, %v1857
    %v1859 = vrot.slane %v1082, %v1858
    %v1860 = vsel %vm1294, %v1859, %v1855
    %v1861 = vlaneseq
    %v1862 = vshrl.u32 %v1861, 7
    %v1863 = vsub.s32 %v1296, %v1862
    %v1864 = vrot.slane %v1084, %v1863
    %v1865 = vsel %vm1301, %v1864, %v1860
    %v1866 = vlaneseq
    %v1867 = vshrl.u32 %v1866, 7
    %v1868 = vsub.s32 %v1303, %v1867
    %v1869 = vrot.slane %v1086, %v1868
    %v1870 = vsel %vm1308, %v1869, %v1865
    %v1871 = vlaneseq
    %v1872 = vshrl.u32 %v1871, 7
    %v1873 = vsub.s32 %v1310, %v1872
    %v1874 = vrot.slane %v1088, %v1873
    %v1875 = vsel %vm1315, %v1874, %v1870
    %v1876 = vlaneseq
    %v1877 = vshrl.u32 %v1876, 7
    %v1878 = vsub.s32 %v1317, %v1877
    %v1879 = vrot.slane %v1090, %v1878
    %v1880 = vsel %vm1322, %v1879, %v1875
    %v1881 = vlaneseq
    %v1882 = vshrl.u32 %v1881, 7
    %v1883 = vsub.s32 %v1324, %v1882
    %v1884 = vrot.slane %v1092, %v1883
    %v1885 = vsel %vm1329, %v1884, %v1880
    %v1886 = vlaneseq
    %v1887 = vshrl.u32 %v1886, 7
    %v1888 = vsub.s32 %v1331, %v1887
    %v1889 = vrot.slane %v1094, %v1888
    %v1890 = vsel %vm1336, %v1889, %v1885
    %vm1891 = vcmask 1041409
    %v1892 = vsel %vm1891, %v1416, %v1337
    %vm1893 = vcmask 1042434
    %v1894 = vsel %vm1893, %v1495, %v1892
    %vm1895 = vcmask 1043459
    %v1896 = vsel %vm1895, %v1574, %v1894
    %vm1897 = vcmask 1044484
    %v1898 = vsel %vm1897, %v1653, %v1896
    %vm1899 = vcmask 1045509
    %v1900 = vsel %vm1899, %v1732, %v1898
    %vm1901 = vcmask 1046534
    %v1902 = vsel %vm1901, %v1811, %v1900
    %vm1903 = vcmask 1047559
    %v1904 = vsel %vm1903, %v1890, %v1902
    %v1906 = vsel %vm1100, %v1904, -1e+30
    %v1907 = vld [vmem:[#allocation2] sm:$0xff]
    %1908 = vmax.xlane.f32.xlu0 %v1906
    %v1909 = vpop.xlane.xlu0 %1908
    %v1910 = vmax.f32 %v1907, %v1909
    %v1911 = vsub.f32 %v1907, %v1910
    %v1912 = vmul.f32 %v1911, 1.442695
    %v1913 = vpow.pop %v1912
    %1915 = vset.pattern.permute.xlu0 0
    %1916 = vperm.xlu0 %1915, %v1910
    %v1917 = vpop.permute.xlu0 %1916
    %v1919 = vsub.f32 %v1906, %v1917
    %v1920 = vmul.f32 %v1919, 1.442695
    %v1921 = vpow.pop %v1920
    %v1922 = vld [vmem:[#allocation3] sm:$0xff]
    %v1923 = vmul.f32 %v1913, %v1922
    %1924 = vadd.xlane.f32.xlu0 %v1921
    %v1925 = vpop.xlane.xlu0 %1924
    %v1926 = vadd.f32 %v1923, %v1925
    %vm1927 = vcmask 7168
    %1928 = vst.msk [vmem:[#allocation3] sm:$0xff] %vm1927, %v1926
    %v1929 = vld [vmem:[#allocation4] sm:$0xff]
    %1931 = vset.pattern.permute.xlu0 0
    %1932 = vperm.xlu0 %1931, %v1913
    %v1933 = vpop.permute.xlu0 %1932
    %v1935 = vmul.f32 %v1933, %v1929
    %1936 = vmatprep.subr.mxu0 0.0
    %1937 = vmatpush1.msra.mxu0 %v195
    %1938 = vmatprep.subr.mxu0 0.0
    %1939 = vmatpush1.msra.mxu0 %v194
    %1940 = vmatprep.subr.mxu0 0.0
    %1941 = vmatpush1.msra.mxu0 %v193
    %1942 = vmatprep.subr.mxu0 0.0
    %1943 = vmatpush1.msra.mxu0 %v192
    %1944 = vmatprep.subr.mxu0 0.0
    %1945 = vmatpush1.msra.mxu0 %v191
    %1946 = vmatprep.subr.mxu0 0.0
    %1947 = vmatpush1.msra.mxu0 %v190
    %1948 = vmatprep.subr.mxu0 0.0
    %1949 = vmatpush1.msra.mxu0 %v189
    %1950 = vmatprep.subr.mxu0 0.0
    %1951 = vmatpush1.msra.mxu0 %v188
    %1952 = vmatprep.subr.mxu0 0.0
    %1953 = vmatpush1.msra.mxu0 %v187
    %1954 = vmatprep.subr.mxu0 0.0
    %1955 = vmatpush1.msra.mxu0 %v186
    %1956 = vmatprep.subr.mxu0 0.0
    %1957 = vmatpush1.msra.mxu0 %v185
    %1958 = vmatprep.subr.mxu0 0.0
    %1959 = vmatpush1.msra.mxu0 %v184
    %1960 = vmatprep.subr.mxu0 0.0
    %1961 = vmatpush1.msra.mxu0 %v183
    %1962 = vmatprep.subr.mxu0 0.0
    %1963 = vmatpush1.msra.mxu0 %v182
    %1964 = vmatprep.subr.mxu0 0.0
    %1965 = vmatpush1.msra.mxu0 %v181
    %1966 = vmatprep.subr.mxu0 0.0
    %1967 = vmatpush1.msra.mxu0 %v180
    %1968 = vmatprep.subr.mxu0 0.0
    %1969 = vmatpush2.msra.mxu0 0.0
    %1970 = vmatprep.subr.mxu0 0.0
    %1971 = vmatpush2.msra.mxu0 0.0
    %1972 = vmatprep.subr.mxu0 0.0
    %1973 = vmatpush2.msra.mxu0 0.0
    %1974 = vmatprep.subr.mxu0 0.0
    %1975 = vmatpush2.msra.mxu0 0.0
    %1976 = vmatprep.subr.mxu0 0.0
    %1977 = vmatpush2.msra.mxu0 0.0
    %1978 = vmatprep.subr.mxu0 0.0
    %1979 = vmatpush2.msra.mxu0 0.0
    %1980 = vmatprep.subr.mxu0 0.0
    %1981 = vmatpush2.msra.mxu0 0.0
    %1982 = vmatprep.subr.mxu0 0.0
    %1983 = vmatpush2.msra.mxu0 0.0
    %1984 = vmatprep.subr.mxu0 0.0
    %1985 = vmatpush2.msra.mxu0 0.0
    %1986 = vmatprep.subr.mxu0 0.0
    %1987 = vmatpush2.msra.mxu0 0.0
    %1988 = vmatprep.subr.mxu0 0.0
    %1989 = vmatpush2.msra.mxu0 0.0
    %1990 = vmatprep.subr.mxu0 0.0
    %1991 = vmatpush2.msra.mxu0 0.0
    %1992 = vmatprep.subr.mxu0 0.0
    %1993 = vmatpush2.msra.mxu0 0.0
    %1994 = vmatprep.subr.mxu0 0.0
    %1995 = vmatpush2.msra.mxu0 0.0
    %1996 = vmatprep.subr.mxu0 0.0
    %1997 = vmatpush2.msra.mxu0 0.0
    %1998 = vmatprep.subr.mxu0 0.0
    %1999 = vmatpush2.msra.mxu0 0.0
    %2000 = vmatprep.mubr.f32.mxu0 0.0
    %2001 = vmatmul.mubr.f32.gmra.mxu0 %v1921
    %v2002 = vpop.f32.mrf.mxu0
    %v2003 = vadd.f32 0.0, %v2002
    %v2004 = vpop.f32.mrf.mxu0
    %2005 = vdwg.mxu0
    %v2006 = vadd.f32 %v1935, %v2003
    %2007 = vst [vmem:[#allocation4] sm:$0xff] %v2006
    %2008 = vst.msk [vmem:[#allocation2] sm:$0xff] %vm1927, %v1910
    // Predicated region
    $region46: #{tpu_custom_call.1} parent=1 // pred_check
      %p2009 = pneg %p77
    $region47: #{tpu_custom_call.1} parent=1 // pred_check_branch
      %2011 = sbr.rel (%p2009) target = $region49
    $region48: #{tpu_custom_call.1} parent=1 // pred_region
      %v2012 = vld [vmem:[#allocation3] sm:$0xff]
      %v2013 = vrcp.pop %v2012
      %v2014 = vld [vmem:[#allocation4] sm:$0xff]
      %2016 = vset.pattern.permute.xlu0 0
      %2017 = vperm.xlu0 %2016, %v2013
      %v2018 = vpop.permute.xlu0 %2017
      %v2020 = vmul.f32 %v2014, %v2018
      %2021 = vst [vmem:[#allocation14] sm:$0xff] %v2020
    $region49: #{tpu_custom_call.1} parent=1 // pred_fallthru
      _
    // Predicated region
    $region50: #{tpu_custom_call.1} parent=1 // pred_check
      _
    $region51: #{tpu_custom_call.1} parent=1 // pred_check_branch
      %2023 = sbr.rel (0) target = $region53
    $region52: #{tpu_custom_call.1} parent=1 // pred_region
      %s2025 = ssub.s32 128, 128
      %2026 = vsyncadd [#allocation8], %s2025
      %s2028 = sshll.u32 [#allocation14], 4
      %s2029 = int_to_ptr.vmem [resolvable:$true] %s2028
      %2031 = dma.vmem_to_hbm [thread:$0]  %s2029, 128, %s6, [#allocation8]
    $region53: #{tpu_custom_call.1} parent=1 // pred_fallthru
      _
    // Predicated region
    $region54: #{tpu_custom_call.1} parent=1 // pred_check
      _
    $region55: #{tpu_custom_call.1} parent=1 // pred_check_branch
      %2033 = sbr.rel (0) target = $region57
    $region56: #{tpu_custom_call.1} parent=1 // pred_region
      %2034 = dma.done [#allocation8], 128
    $region57: #{tpu_custom_call.1} parent=1 // pred_fallthru
      _
    %2035 = vsyncpa [#allocation7], 1
    %2036 = vsyncpa [#allocation10], 1
    %2037 = vsyncpa [#allocation13], 1
    %2038 = vsyncpa [#allocation8], 1

</llo_original>
